<compile_context>
chip_gen: v5e
topology: v5e:2x2
jax: 0.10.0
libtpu: 0.0.40
codegen_flags: <defaults>
</compile_context>

<pallas_src>
import functools

import numpy as np
import jax
import jax.numpy as jnp
from jax import lax
from jax.experimental import pallas as pl
from jax.experimental.pallas import tpu as pltpu

# ---- hyper-parameters matching CoTsSE.__init__ ----
KS = 3                 # kernel_size (3 -> padding 1)
FACTOR = 8
TOPK_SPATIAL_1 = 169   # self.topk1 (TopKSpatialPool2d)
TOPK_SPATIAL_2 = 9     # self.topk2 (TopKSpatialPool2d)
TOPK_CHANNEL = 225     # newcSE.avgpool (TopKChannelPool2d)
BN_EPS = 1e-5


# ----------------- in-kernel helpers -----------------
def _sigmoid(x):
    return 1.0 / (1.0 + jnp.exp(-x))


def _float_key(x):
    """Monotone int32 ordering key: key(a) < key(b)  <=>  a < b (finite f32)."""
    b = pltpu.bitcast(x, jnp.int32)
    mask = jnp.where(b < 0, jnp.int32(0x7FFFFFFF), jnp.int32(0))
    return b ^ mask


def _key_to_float(k):
    """Inverse of _float_key (it is an involution on the bit pattern)."""
    mask = jnp.where(k < 0, jnp.int32(0x7FFFFFFF), jnp.int32(0))
    return pltpu.bitcast(k ^ mask, jnp.float32)


def _topk_mean(x, k, axis, key=None):
    """Exact mean of the k largest values of f32 `x` along `axis` (keepdims).

    Finds the k-th largest value by a 32-step binary search over int32
    ordering keys (one f32 counting reduction per step), then
      sum(top-k) = sum(x where x > t) + (k - #{x > t}) * t
    which is tie-invariant, i.e. matches torch.sort(descending)[:k].sum().
    """
    n = x.shape[axis]
    k = min(k, n)
    if k == n:
        return jnp.mean(x, axis=axis, keepdims=True)
    if key is None:
        key = _float_key(x)

    red_shape = tuple(1 if a == axis else d for a, d in enumerate(x.shape))
    lo = jnp.full(red_shape, jnp.iinfo(jnp.int32).min, jnp.int32)
    hi = jnp.full(red_shape, jnp.iinfo(jnp.int32).max, jnp.int32)
    kf = jnp.float32(k)

    def body(_, carry):
        lo, hi = carry
        # ceil((lo + hi) / 2) without int32 overflow.
        mid = jnp.right_shift(lo, 1) + jnp.right_shift(hi, 1) + ((lo | hi) & 1)
        cnt = jnp.sum(jnp.where(key >= mid, 1.0, 0.0), axis=axis, keepdims=True)
        ge = cnt >= kf
        return jnp.where(ge, mid, lo), jnp.where(ge, hi, mid - 1)

    lo, _ = lax.fori_loop(0, 32, body, (lo, hi))

    kth_val = _key_to_float(lo)                               # k-th largest value
    gt = key > lo
    cnt_gt = jnp.sum(jnp.where(gt, 1.0, 0.0), axis=axis, keepdims=True)
    sum_gt = jnp.sum(jnp.where(gt, x, 0.0), axis=axis, keepdims=True)
    return (sum_gt + (kf - cnt_gt) * kth_val) * (1.0 / k)


# ----------------- the Pallas kernel -----------------
def cotsse_kernel(x_ref, tapa_ref, tapm_ref,
                  wsq_ref, wex_ref,
                  wv_ref, bnv_s_ref, bnv_b_ref,
                  w1a_ref, w1b_ref, bna_s_ref, bna_b_ref,
                  w2_ref, b2_ref,
                  o_ref, *, conv_offsets):
    x = x_ref[0]                                           # (C, HW) f32
    _, HW = x.shape
    x_bf = x.astype(jnp.bfloat16)
    xkey = _float_key(x)                                   # shared ordering keys

    # --- topk1 / topk2 spatial pools: top-k over channels per pixel -> (1, HW)
    avg_row = _topk_mean(x, TOPK_SPATIAL_1, axis=0, key=xkey)
    max_row = _topk_mean(x, TOPK_SPATIAL_2, axis=0, key=xkey)

    # --- conv1: 3x3 conv (2 -> 1 ch, pad 1) as 9 masked lane-rolls -----------
    # tap weights * border-validity masks are precomputed on the host.
    q = jnp.zeros((1, HW), jnp.float32)
    for t, off in enumerate(conv_offsets):
        sh = (-off) % HW
        ra = avg_row if sh == 0 else pltpu.roll(avg_row, sh, axis=1)
        rm = max_row if sh == 0 else pltpu.roll(max_row, sh, axis=1)
        q = q + tapa_ref[t:t + 1, :] * ra + tapm_ref[t:t + 1, :] * rm
    sig_q = _sigmoid(q)                                    # (1, HW)

    # --- newcSE channel attention branch -------------------------------------
    z0 = _topk_mean(x, TOPK_CHANNEL, axis=1, key=xkey)     # (C, 1)
    z1 = jnp.dot(wsq_ref[...], z0, preferred_element_type=jnp.float32)  # (C/2,1)
    z2 = jnp.dot(wex_ref[...], z1, preferred_element_type=jnp.float32)  # (C, 1)
    ch = x * _sigmoid(z2)                                  # (C, HW)

    # --- k1 = x * sigmoid(q) + cSE(x) ----------------------------------------
    k1 = x * sig_q + ch                                    # (C, HW)

    # --- value_embed: 1x1 conv + eval-mode BatchNorm -------------------------
    v = jnp.dot(wv_ref[...], x_bf, preferred_element_type=jnp.float32)
    v = v * bnv_s_ref[...] + bnv_b_ref[...]                # (C, HW)

    # --- attention_embed on y = cat([k1, x]); G/b2 folded into W2 offline ----
    k1_bf = k1.astype(jnp.bfloat16)
    a1 = (jnp.dot(w1a_ref[...], k1_bf, preferred_element_type=jnp.float32)
          + jnp.dot(w1b_ref[...], x_bf, preferred_element_type=jnp.float32))
    a1 = jnp.maximum(a1 * bna_s_ref[...] + bna_b_ref[...], 0.0)   # (Cm, HW)
    att = (jnp.dot(w2_ref[...], a1.astype(jnp.bfloat16),
                   preferred_element_type=jnp.float32)
           + b2_ref[...])                                  # (C, HW)

    # --- softmax over spatial positions (per channel), k2 = softmax(att) * v -
    m = jnp.max(att, axis=1, keepdims=True)
    e = jnp.exp(att - m)
    s = jnp.sum(e, axis=1, keepdims=True)
    k2 = e * pl.reciprocal(s, approx=True) * v             # (C, HW)

    o_ref[0] = k1 + k2


# ----------------- plain-JAX glue -----------------
def build_conv_taps(wc, H, W):
    """Per-tap weight * border-validity masks, shape (KS*KS, H*W)."""
    HW = H * W
    taps = np.zeros((KS * KS, HW), np.float32)
    for i in range(KS):
        for j in range(KS):
            t = i * KS + j
            for h in range(H):
                hh = h + i - 1
                if not (0 <= hh < H):
                    continue
                for w in range(W):
                    ww = w + j - 1
                    if 0 <= ww < W:
                        taps[t, h * W + w] = float(wc[i, j])
    return taps


def cotsse_forward(x_nchw, params):
    B, C, H, W = x_nchw.shape
    HW = H * W
    Cm = (2 * C) // FACTOR

    # conv1 weight (1,2,3,3) -> per-tap masked weights + flattened offsets
    conv1_w = np.asarray(params["conv1_w"])
    tapA = jnp.asarray(build_conv_taps(conv1_w[0, 0], H, W))   # (9, HW)
    tapM = jnp.asarray(build_conv_taps(conv1_w[0, 1], H, W))   # (9, HW)
    offsets = tuple((i - 1) * W + (j - 1)
                    for i in range(KS) for j in range(KS))

    wsq = params["wsq"].astype(jnp.float32)                # (C//2, C)
    wex = params["wex"].astype(jnp.float32)                # (C, C//2)
    wv_bf = params["wv"].astype(jnp.bfloat16)              # (C, C)

    bnv_s = params["bnv_gamma"] / jnp.sqrt(params["bnv_var"] + BN_EPS)
    bnv_b = params["bnv_beta"] - params["bnv_mean"] * bnv_s
    bnv_s = bnv_s.reshape(C, 1)
    bnv_b = bnv_b.reshape(C, 1)

    w1 = params["w1"]                                      # (Cm, 2C)
    w1a_bf = w1[:, :C].astype(jnp.bfloat16)                # acts on k1
    w1b_bf = w1[:, C:].astype(jnp.bfloat16)                # acts on x
    bna_s = params["bna_gamma"] / jnp.sqrt(params["bna_var"] + BN_EPS)
    bna_b = params["bna_beta"] - params["bna_mean"] * bna_s
    bna_s = bna_s.reshape(Cm, 1)
    bna_b = bna_b.reshape(Cm, 1)

    # Fold grouped mean over the 9 taps (and the bias) into W2:
    #   att = G^T (W2 a1 + b2) = (G^T W2) a1 + G^T b2
    w2_eff = jnp.mean(params["w2"].reshape(C, KS * KS, Cm), axis=1)       # (C, Cm)
    b2_eff = jnp.mean(params["b2"].reshape(C, KS * KS), axis=1).reshape(C, 1)
    w2_bf = w2_eff.astype(jnp.bfloat16)

    # NCHW -> (B, C, HW): just a reshape (no transpose needed).
    x_flat = x_nchw.reshape(B, C, HW).astype(jnp.float32)

    full = lambda b: (0, 0)
    kernel = functools.partial(cotsse_kernel, conv_offsets=offsets)
    out = pl.pallas_call(
        kernel,
        out_shape=jax.ShapeDtypeStruct((B, C, HW), jnp.float32),
        grid=(B,),
        in_specs=[
            pl.BlockSpec((1, C, HW), lambda b: (b, 0, 0)),   # x
            pl.BlockSpec((KS * KS, HW), full),               # conv taps (avg)
            pl.BlockSpec((KS * KS, HW), full),               # conv taps (max)
            pl.BlockSpec((C // 2, C), full),                 # Wsq
            pl.BlockSpec((C, C // 2), full),                 # Wex
            pl.BlockSpec((C, C), full),                      # Wv (bf16)
            pl.BlockSpec((C, 1), full),                      # BN(value) scale
            pl.BlockSpec((C, 1), full),                      # BN(value) shift
            pl.BlockSpec((Cm, C), full),                     # W1[:, :C] (bf16)
            pl.BlockSpec((Cm, C), full),                     # W1[:, C:] (bf16)
            pl.BlockSpec((Cm, 1), full),                     # BN(att) scale
            pl.BlockSpec((Cm, 1), full),                     # BN(att) shift
            pl.BlockSpec((C, Cm), full),                     # W2 folded (bf16)
            pl.BlockSpec((C, 1), full),                      # b2 folded
        ],
        out_specs=pl.BlockSpec((1, C, HW), lambda b: (b, 0, 0)),
        compiler_params=pltpu.CompilerParams(
            dimension_semantics=("parallel",),
            vmem_limit_bytes=48 * 1024 * 1024),
    )(x_flat, tapA, tapM, wsq, wex, wv_bf, bnv_s, bnv_b,
      w1a_bf, w1b_bf, bna_s, bna_b, w2_bf, b2_eff)

    return out.reshape(B, C, H, W)


# ----------------- deterministic parameter init -----------------
def init_params(key, C):
    Cm = (2 * C) // FACTOR
    C9 = KS * KS * C
    ks = jax.random.split(key, 16)

    def w(k, shape, scale=0.1):
        return scale * jax.random.normal(k, shape, jnp.float32)

    return {
        "conv1_w": w(ks[0], (1, 2, KS, KS)),
        "wsq": w(ks[1], (C // 2, C)),
        "wex": w(ks[2], (C, C // 2)),
        "wv": w(ks[3], (C, C)),
        "bnv_gamma": 1.0 + 0.1 * jax.random.normal(ks[4], (C,), jnp.float32),
        "bnv_beta": 0.1 * jax.random.normal(ks[5], (C,), jnp.float32),
        "bnv_mean": 0.1 * jax.random.normal(ks[6], (C,), jnp.float32),
        "bnv_var": 1.0 + 0.1 * jax.random.uniform(ks[7], (C,), jnp.float32),
        "w1": w(ks[8], (Cm, 2 * C)),
        "bna_gamma": 1.0 + 0.1 * jax.random.normal(ks[9], (Cm,), jnp.float32),
        "bna_beta": 0.1 * jax.random.normal(ks[10], (Cm,), jnp.float32),
        "bna_mean": 0.1 * jax.random.normal(ks[11], (Cm,), jnp.float32),
        "bna_var": 1.0 + 0.1 * jax.random.uniform(ks[12], (Cm,), jnp.float32),
        "w2": w(ks[13], (C9, Cm)),
        "b2": w(ks[14], (C9,)),
    }


# ----------------- pure-JAX reference (mirrors the PyTorch forward) -----------------
def ref_forward(x, params):
    B, C, H, W = x.shape
    HW = H * W

    def topk_spatial_mean(u, k):
        s = u.reshape(B, C, HW)
        kk = min(k, C)
        srt = jnp.sort(s, axis=1)
        return srt[:, C - kk:, :].mean(axis=1).reshape(B, 1, H, W)

    def topk_channel_mean(u, k):
        s = u.reshape(B, C, HW)
        kk = min(k, HW)
        srt = jnp.sort(s, axis=2)
        return srt[:, :, HW - kk:].mean(axis=2)[:, :, None, None]

    avg_out = topk_spatial_mean(x, TOPK_SPATIAL_1)
    max_out = topk_spatial_mean(x, TOPK_SPATIAL_2)
    q = jnp.concatenate([avg_out, max_out], axis=1)
    q = lax.conv_general_dilated(q, params["conv1_w"], (1, 1), "SAME",
                                 dimension_numbers=("NCHW", "OIHW", "NCHW"))
    sig_q = jax.nn.sigmoid(q)

    z0 = topk_channel_mean(x, TOPK_CHANNEL)
    z1 = jnp.einsum("oc,bcxy->boxy", params["wsq"], z0)
    z2 = jnp.einsum("oc,bcxy->boxy", params["wex"], z1)
    ch = x * jax.nn.sigmoid(z2)
    k1 = x * sig_q + ch

    bnv_s = params["bnv_gamma"] / jnp.sqrt(params["bnv_var"] + BN_EPS)
    bnv_b = params["bnv_beta"] - params["bnv_mean"] * bnv_s
    v = jnp.einsum("oc,bchw->bohw", params["wv"], x)
    v = v * bnv_s[None, :, None, None] + bnv_b[None, :, None, None]
    v = v.reshape(B, C, HW)

    y = jnp.concatenate([k1, x], axis=1)
    a1 = jnp.einsum("oc,bchw->bohw", params["w1"], y)
    bna_s = params["bna_gamma"] / jnp.sqrt(params["bna_var"] + BN_EPS)
    bna_b = params["bna_beta"] - params["bna_mean"] * bna_s
    a1 = jax.nn.relu(a1 * bna_s[None, :, None, None] + bna_b[None, :, None, None])
    a2 = jnp.einsum("oc,bchw->bohw", params["w2"], a1) + params["b2"][None, :, None, None]
    att = a2.reshape(B, C, KS * KS, H, W).mean(axis=2).reshape(B, C, HW)
    k2 = (jax.nn.softmax(att, axis=-1) * v).reshape(B, C, H, W)
    return k1 + k2


if __name__ == "__main__":
    # Config 1: small smoke test.  Config 2 (C=256) exercises all partial
    # top-k paths (top-169 / top-9 over channels, top-225 over HW=256).
    for (B, C, H, W) in [(2, 16, 16, 16), (1, 256, 16, 16)]:
        key = jax.random.PRNGKey(0)
        kx, kp = jax.random.split(key)
        x = jax.random.normal(kx, (B, C, H, W), jnp.float32)
        params = init_params(kp, C)

        out = jax.block_until_ready(cotsse_forward(x, params))
        ref = jax.block_until_ready(ref_forward(x, params))

        assert out.shape == (B, C, H, W)
        assert bool(jnp.isfinite(out).all())
        np.testing.assert_allclose(np.asarray(out), np.asarray(ref),
                                   rtol=2e-2, atol=2e-2)
    print("KERNEL_OK")
</pallas_src>

<mosaic_0001>
module attributes {stable_mosaic.version = 11 : i64} {
  func.func @cotsse_kernel(%arg0: i32, %arg1: memref<1x16x256xf32, #tpu.memory_space<vmem>>, %arg2: memref<9x256xf32, #tpu.memory_space<vmem>>, %arg3: memref<9x256xf32, #tpu.memory_space<vmem>>, %arg4: memref<8x16xf32, #tpu.memory_space<vmem>>, %arg5: memref<16x8xf32, #tpu.memory_space<vmem>>, %arg6: memref<16x16xbf16, #tpu.memory_space<vmem>>, %arg7: memref<16x1xf32, #tpu.memory_space<vmem>>, %arg8: memref<16x1xf32, #tpu.memory_space<vmem>>, %arg9: memref<4x16xbf16, #tpu.memory_space<vmem>>, %arg10: memref<4x16xbf16, #tpu.memory_space<vmem>>, %arg11: memref<4x1xf32, #tpu.memory_space<vmem>>, %arg12: memref<4x1xf32, #tpu.memory_space<vmem>>, %arg13: memref<16x4xbf16, #tpu.memory_space<vmem>>, %arg14: memref<16x1xf32, #tpu.memory_space<vmem>>, %arg15: memref<1x16x256xf32, #tpu.memory_space<vmem>>) attributes {dimension_semantics = [#tpu.dimension_semantics<parallel>], iteration_bounds = array<i64: 2>, scalar_prefetch = 0 : i64, scratch_operands = 0 : i64, tpu.core_type = #tpu.core_type<tc>, window_params = [{transform_indices = @transform_0, window_bounds = array<i64: 1, 16, 256>}, {pipeline_mode = #tpu.pipeline_mode<synchronous>, transform_indices = @transform_1, window_bounds = array<i64: 9, 256>}, {pipeline_mode = #tpu.pipeline_mode<synchronous>, transform_indices = @transform_2, window_bounds = array<i64: 9, 256>}, {pipeline_mode = #tpu.pipeline_mode<synchronous>, transform_indices = @transform_3, window_bounds = array<i64: 8, 16>}, {pipeline_mode = #tpu.pipeline_mode<synchronous>, transform_indices = @transform_4, window_bounds = array<i64: 16, 8>}, {pipeline_mode = #tpu.pipeline_mode<synchronous>, transform_indices = @transform_5, window_bounds = array<i64: 16, 16>}, {pipeline_mode = #tpu.pipeline_mode<synchronous>, transform_indices = @transform_6, window_bounds = array<i64: 16, 1>}, {pipeline_mode = #tpu.pipeline_mode<synchronous>, transform_indices = @transform_7, window_bounds = array<i64: 16, 1>}, {pipeline_mode = #tpu.pipeline_mode<synchronous>, transform_indices = @transform_8, window_bounds = array<i64: 4, 16>}, {pipeline_mode = #tpu.pipeline_mode<synchronous>, transform_indices = @transform_9, window_bounds = array<i64: 4, 16>}, {pipeline_mode = #tpu.pipeline_mode<synchronous>, transform_indices = @transform_10, window_bounds = array<i64: 4, 1>}, {pipeline_mode = #tpu.pipeline_mode<synchronous>, transform_indices = @transform_11, window_bounds = array<i64: 4, 1>}, {pipeline_mode = #tpu.pipeline_mode<synchronous>, transform_indices = @transform_12, window_bounds = array<i64: 16, 4>}, {pipeline_mode = #tpu.pipeline_mode<synchronous>, transform_indices = @transform_13, window_bounds = array<i64: 16, 1>}, {transform_indices = @transform_14, window_bounds = array<i64: 1, 16, 256>}]} {
    %c0 = arith.constant 0 : index
    %c0_0 = arith.constant 0 : index
    %c0_1 = arith.constant 0 : index
    %0 = vector.load %arg1[%c0, %c0_0, %c0_1] : memref<1x16x256xf32, #tpu.memory_space<vmem>>, vector<1x16x256xf32>
    %1 = vector.shape_cast %0 : vector<1x16x256xf32> to vector<16x256xf32>
    %2 = arith.truncf %1 : vector<16x256xf32> to vector<16x256xbf16>
    %3 = tpu.bitcast %1 : vector<16x256xf32> -> vector<16x256xi32>
    %c0_i32 = arith.constant 0 : i32
    %4 = vector.broadcast %c0_i32 : i32 to vector<16x256xi32>
    %5 = arith.cmpi slt, %3, %4 : vector<16x256xi32>
    %c2147483647_i32 = arith.constant 2147483647 : i32
    %c0_i32_2 = arith.constant 0 : i32
    %6 = vector.broadcast %c2147483647_i32 : i32 to vector<16x256xi32>
    %7 = vector.broadcast %c0_i32_2 : i32 to vector<16x256xi32>
    %8 = arith.select %5, %6, %7 : vector<16x256xi1>, vector<16x256xi32>
    %9 = arith.xori %3, %8 : vector<16x256xi32>
    %cst = arith.constant dense<0.000000e+00> : vector<256xf32>
    %10 = vector.multi_reduction <add>, %1, %cst [0] : vector<16x256xf32> to vector<256xf32>
    %11 = vector.shape_cast %10 : vector<256xf32> to vector<1x256xf32>
    %cst_3 = arith.constant 1.600000e+01 : f32
    %12 = vector.broadcast %cst_3 : f32 to vector<1x256xf32>
    %13 = arith.divf %11, %12 : vector<1x256xf32>
    %c-2147483648_i32 = arith.constant -2147483648 : i32
    %14 = vector.broadcast %c-2147483648_i32 : i32 to vector<1x256xi32>
    %c2147483647_i32_4 = arith.constant 2147483647 : i32
    %15 = vector.broadcast %c2147483647_i32_4 : i32 to vector<1x256xi32>
    %cst_5 = arith.constant 9.000000e+00 : f32
    %c0_i32_6 = arith.constant 0 : i32
    %c32_i32 = arith.constant 32 : i32
    %16 = arith.addi %c0_i32_6, %c32_i32 : i32
    %c1_i32 = arith.constant 1 : i32
    %17:2 = scf.for %arg16 = %c0_i32_6 to %16 step %c1_i32 iter_args(%arg17 = %14, %arg18 = %15) -> (vector<1x256xi32>, vector<1x256xi32>)  : i32 {
      %c1_i32_111 = arith.constant 1 : i32
      %207 = vector.broadcast %c1_i32_111 : i32 to vector<1x256xi32>
      %208 = arith.shrsi %arg17, %207 : vector<1x256xi32>
      %c1_i32_112 = arith.constant 1 : i32
      %209 = vector.broadcast %c1_i32_112 : i32 to vector<1x256xi32>
      %210 = arith.shrsi %arg18, %209 : vector<1x256xi32>
      %211 = arith.addi %208, %210 : vector<1x256xi32>
      %212 = arith.ori %arg17, %arg18 : vector<1x256xi32>
      %c1_i32_113 = arith.constant 1 : i32
      %213 = vector.broadcast %c1_i32_113 : i32 to vector<1x256xi32>
      %214 = arith.andi %212, %213 : vector<1x256xi32>
      %215 = arith.addi %211, %214 : vector<1x256xi32>
      %216 = vector.broadcast %215 : vector<1x256xi32> to vector<16x256xi32>
      %217 = arith.cmpi sge, %9, %216 : vector<16x256xi32>
      %cst_114 = arith.constant 1.000000e+00 : f32
      %cst_115 = arith.constant 0.000000e+00 : f32
      %218 = vector.broadcast %cst_114 : f32 to vector<16x256xf32>
      %219 = vector.broadcast %cst_115 : f32 to vector<16x256xf32>
      %220 = arith.select %217, %218, %219 : vector<16x256xi1>, vector<16x256xf32>
      %cst_116 = arith.constant dense<0.000000e+00> : vector<256xf32>
      %221 = vector.multi_reduction <add>, %220, %cst_116 [0] : vector<16x256xf32> to vector<256xf32>
      %222 = vector.shape_cast %221 : vector<256xf32> to vector<1x256xf32>
      %223 = vector.broadcast %cst_5 : f32 to vector<1x256xf32>
      %224 = arith.cmpf oge, %222, %223 : vector<1x256xf32>
      %225 = arith.select %224, %215, %arg17 : vector<1x256xi1>, vector<1x256xi32>
      %c1_i32_117 = arith.constant 1 : i32
      %226 = vector.broadcast %c1_i32_117 : i32 to vector<1x256xi32>
      %227 = arith.subi %215, %226 : vector<1x256xi32>
      %228 = arith.select %224, %arg18, %227 : vector<1x256xi1>, vector<1x256xi32>
      scf.yield %225, %228 : vector<1x256xi32>, vector<1x256xi32>
    }
    %c0_i32_7 = arith.constant 0 : i32
    %18 = vector.broadcast %c0_i32_7 : i32 to vector<1x256xi32>
    %19 = arith.cmpi slt, %17#0, %18 : vector<1x256xi32>
    %c2147483647_i32_8 = arith.constant 2147483647 : i32
    %c0_i32_9 = arith.constant 0 : i32
    %20 = vector.broadcast %c2147483647_i32_8 : i32 to vector<1x256xi32>
    %21 = vector.broadcast %c0_i32_9 : i32 to vector<1x256xi32>
    %22 = arith.select %19, %20, %21 : vector<1x256xi1>, vector<1x256xi32>
    %23 = arith.xori %17#0, %22 : vector<1x256xi32>
    %24 = tpu.bitcast %23 : vector<1x256xi32> -> vector<1x256xf32>
    %25 = vector.broadcast %17#0 : vector<1x256xi32> to vector<16x256xi32>
    %26 = arith.cmpi sgt, %9, %25 : vector<16x256xi32>
    %cst_10 = arith.constant 1.000000e+00 : f32
    %cst_11 = arith.constant 0.000000e+00 : f32
    %27 = vector.broadcast %cst_10 : f32 to vector<16x256xf32>
    %28 = vector.broadcast %cst_11 : f32 to vector<16x256xf32>
    %29 = arith.select %26, %27, %28 : vector<16x256xi1>, vector<16x256xf32>
    %cst_12 = arith.constant dense<0.000000e+00> : vector<256xf32>
    %30 = vector.multi_reduction <add>, %29, %cst_12 [0] : vector<16x256xf32> to vector<256xf32>
    %31 = vector.shape_cast %30 : vector<256xf32> to vector<1x256xf32>
    %cst_13 = arith.constant 0.000000e+00 : f32
    %32 = vector.broadcast %cst_13 : f32 to vector<16x256xf32>
    %33 = arith.select %26, %1, %32 : vector<16x256xi1>, vector<16x256xf32>
    %cst_14 = arith.constant dense<0.000000e+00> : vector<256xf32>
    %34 = vector.multi_reduction <add>, %33, %cst_14 [0] : vector<16x256xf32> to vector<256xf32>
    %35 = vector.shape_cast %34 : vector<256xf32> to vector<1x256xf32>
    %cst_15 = arith.constant 9.000000e+00 : f32
    %36 = vector.broadcast %cst_15 : f32 to vector<1x256xf32>
    %37 = arith.subf %36, %31 : vector<1x256xf32>
    %38 = arith.mulf %37, %24 : vector<1x256xf32>
    %39 = arith.addf %35, %38 : vector<1x256xf32>
    %cst_16 = arith.constant 0.111111112 : f32
    %40 = vector.broadcast %cst_16 : f32 to vector<1x256xf32>
    %41 = arith.mulf %39, %40 : vector<1x256xf32>
    %cst_17 = arith.constant 0.000000e+00 : f32
    %42 = vector.broadcast %cst_17 : f32 to vector<1x256xf32>
    %c17_i32 = arith.constant 17 : i32
    %43 = tpu.dynamic_rotate %13 by %c17_i32 dim 1 : vector<1x256xf32>, i32 -> vector<1x256xf32>
    %c17_i32_18 = arith.constant 17 : i32
    %44 = tpu.dynamic_rotate %41 by %c17_i32_18 dim 1 : vector<1x256xf32>, i32 -> vector<1x256xf32>
    %c0_19 = arith.constant 0 : index
    %c0_20 = arith.constant 0 : index
    %45 = vector.load %arg2[%c0_19, %c0_20] : memref<9x256xf32, #tpu.memory_space<vmem>>, vector<1x256xf32>
    %46 = arith.mulf %45, %43 : vector<1x256xf32>
    %47 = arith.addf %42, %46 : vector<1x256xf32>
    %c0_21 = arith.constant 0 : index
    %c0_22 = arith.constant 0 : index
    %48 = vector.load %arg3[%c0_21, %c0_22] : memref<9x256xf32, #tpu.memory_space<vmem>>, vector<1x256xf32>
    %49 = arith.mulf %48, %44 : vector<1x256xf32>
    %50 = arith.addf %47, %49 : vector<1x256xf32>
    %c16_i32 = arith.constant 16 : i32
    %51 = tpu.dynamic_rotate %13 by %c16_i32 dim 1 : vector<1x256xf32>, i32 -> vector<1x256xf32>
    %c16_i32_23 = arith.constant 16 : i32
    %52 = tpu.dynamic_rotate %41 by %c16_i32_23 dim 1 : vector<1x256xf32>, i32 -> vector<1x256xf32>
    %c1 = arith.constant 1 : index
    %c0_24 = arith.constant 0 : index
    %53 = vector.load %arg2[%c1, %c0_24] : memref<9x256xf32, #tpu.memory_space<vmem>>, vector<1x256xf32>
    %54 = arith.mulf %53, %51 : vector<1x256xf32>
    %55 = arith.addf %50, %54 : vector<1x256xf32>
    %c1_25 = arith.constant 1 : index
    %c0_26 = arith.constant 0 : index
    %56 = vector.load %arg3[%c1_25, %c0_26] : memref<9x256xf32, #tpu.memory_space<vmem>>, vector<1x256xf32>
    %57 = arith.mulf %56, %52 : vector<1x256xf32>
    %58 = arith.addf %55, %57 : vector<1x256xf32>
    %c15_i32 = arith.constant 15 : i32
    %59 = tpu.dynamic_rotate %13 by %c15_i32 dim 1 : vector<1x256xf32>, i32 -> vector<1x256xf32>
    %c15_i32_27 = arith.constant 15 : i32
    %60 = tpu.dynamic_rotate %41 by %c15_i32_27 dim 1 : vector<1x256xf32>, i32 -> vector<1x256xf32>
    %c2 = arith.constant 2 : index
    %c0_28 = arith.constant 0 : index
    %61 = vector.load %arg2[%c2, %c0_28] : memref<9x256xf32, #tpu.memory_space<vmem>>, vector<1x256xf32>
    %62 = arith.mulf %61, %59 : vector<1x256xf32>
    %63 = arith.addf %58, %62 : vector<1x256xf32>
    %c2_29 = arith.constant 2 : index
    %c0_30 = arith.constant 0 : index
    %64 = vector.load %arg3[%c2_29, %c0_30] : memref<9x256xf32, #tpu.memory_space<vmem>>, vector<1x256xf32>
    %65 = arith.mulf %64, %60 : vector<1x256xf32>
    %66 = arith.addf %63, %65 : vector<1x256xf32>
    %c1_i32_31 = arith.constant 1 : i32
    %67 = tpu.dynamic_rotate %13 by %c1_i32_31 dim 1 : vector<1x256xf32>, i32 -> vector<1x256xf32>
    %c1_i32_32 = arith.constant 1 : i32
    %68 = tpu.dynamic_rotate %41 by %c1_i32_32 dim 1 : vector<1x256xf32>, i32 -> vector<1x256xf32>
    %c3 = arith.constant 3 : index
    %c0_33 = arith.constant 0 : index
    %69 = vector.load %arg2[%c3, %c0_33] : memref<9x256xf32, #tpu.memory_space<vmem>>, vector<1x256xf32>
    %70 = arith.mulf %69, %67 : vector<1x256xf32>
    %71 = arith.addf %66, %70 : vector<1x256xf32>
    %c3_34 = arith.constant 3 : index
    %c0_35 = arith.constant 0 : index
    %72 = vector.load %arg3[%c3_34, %c0_35] : memref<9x256xf32, #tpu.memory_space<vmem>>, vector<1x256xf32>
    %73 = arith.mulf %72, %68 : vector<1x256xf32>
    %74 = arith.addf %71, %73 : vector<1x256xf32>
    %c4 = arith.constant 4 : index
    %c0_36 = arith.constant 0 : index
    %75 = vector.load %arg2[%c4, %c0_36] : memref<9x256xf32, #tpu.memory_space<vmem>>, vector<1x256xf32>
    %76 = arith.mulf %75, %13 : vector<1x256xf32>
    %77 = arith.addf %74, %76 : vector<1x256xf32>
    %c4_37 = arith.constant 4 : index
    %c0_38 = arith.constant 0 : index
    %78 = vector.load %arg3[%c4_37, %c0_38] : memref<9x256xf32, #tpu.memory_space<vmem>>, vector<1x256xf32>
    %79 = arith.mulf %78, %41 : vector<1x256xf32>
    %80 = arith.addf %77, %79 : vector<1x256xf32>
    %c255_i32 = arith.constant 255 : i32
    %81 = tpu.dynamic_rotate %13 by %c255_i32 dim 1 : vector<1x256xf32>, i32 -> vector<1x256xf32>
    %c255_i32_39 = arith.constant 255 : i32
    %82 = tpu.dynamic_rotate %41 by %c255_i32_39 dim 1 : vector<1x256xf32>, i32 -> vector<1x256xf32>
    %c5 = arith.constant 5 : index
    %c0_40 = arith.constant 0 : index
    %83 = vector.load %arg2[%c5, %c0_40] : memref<9x256xf32, #tpu.memory_space<vmem>>, vector<1x256xf32>
    %84 = arith.mulf %83, %81 : vector<1x256xf32>
    %85 = arith.addf %80, %84 : vector<1x256xf32>
    %c5_41 = arith.constant 5 : index
    %c0_42 = arith.constant 0 : index
    %86 = vector.load %arg3[%c5_41, %c0_42] : memref<9x256xf32, #tpu.memory_space<vmem>>, vector<1x256xf32>
    %87 = arith.mulf %86, %82 : vector<1x256xf32>
    %88 = arith.addf %85, %87 : vector<1x256xf32>
    %c241_i32 = arith.constant 241 : i32
    %89 = tpu.dynamic_rotate %13 by %c241_i32 dim 1 : vector<1x256xf32>, i32 -> vector<1x256xf32>
    %c241_i32_43 = arith.constant 241 : i32
    %90 = tpu.dynamic_rotate %41 by %c241_i32_43 dim 1 : vector<1x256xf32>, i32 -> vector<1x256xf32>
    %c6 = arith.constant 6 : index
    %c0_44 = arith.constant 0 : index
    %91 = vector.load %arg2[%c6, %c0_44] : memref<9x256xf32, #tpu.memory_space<vmem>>, vector<1x256xf32>
    %92 = arith.mulf %91, %89 : vector<1x256xf32>
    %93 = arith.addf %88, %92 : vector<1x256xf32>
    %c6_45 = arith.constant 6 : index
    %c0_46 = arith.constant 0 : index
    %94 = vector.load %arg3[%c6_45, %c0_46] : memref<9x256xf32, #tpu.memory_space<vmem>>, vector<1x256xf32>
    %95 = arith.mulf %94, %90 : vector<1x256xf32>
    %96 = arith.addf %93, %95 : vector<1x256xf32>
    %c240_i32 = arith.constant 240 : i32
    %97 = tpu.dynamic_rotate %13 by %c240_i32 dim 1 : vector<1x256xf32>, i32 -> vector<1x256xf32>
    %c240_i32_47 = arith.constant 240 : i32
    %98 = tpu.dynamic_rotate %41 by %c240_i32_47 dim 1 : vector<1x256xf32>, i32 -> vector<1x256xf32>
    %c7 = arith.constant 7 : index
    %c0_48 = arith.constant 0 : index
    %99 = vector.load %arg2[%c7, %c0_48] : memref<9x256xf32, #tpu.memory_space<vmem>>, vector<1x256xf32>
    %100 = arith.mulf %99, %97 : vector<1x256xf32>
    %101 = arith.addf %96, %100 : vector<1x256xf32>
    %c7_49 = arith.constant 7 : index
    %c0_50 = arith.constant 0 : index
    %102 = vector.load %arg3[%c7_49, %c0_50] : memref<9x256xf32, #tpu.memory_space<vmem>>, vector<1x256xf32>
    %103 = arith.mulf %102, %98 : vector<1x256xf32>
    %104 = arith.addf %101, %103 : vector<1x256xf32>
    %c239_i32 = arith.constant 239 : i32
    %105 = tpu.dynamic_rotate %13 by %c239_i32 dim 1 : vector<1x256xf32>, i32 -> vector<1x256xf32>
    %c239_i32_51 = arith.constant 239 : i32
    %106 = tpu.dynamic_rotate %41 by %c239_i32_51 dim 1 : vector<1x256xf32>, i32 -> vector<1x256xf32>
    %c8 = arith.constant 8 : index
    %c0_52 = arith.constant 0 : index
    %107 = vector.load %arg2[%c8, %c0_52] : memref<9x256xf32, #tpu.memory_space<vmem>>, vector<1x256xf32>
    %108 = arith.mulf %107, %105 : vector<1x256xf32>
    %109 = arith.addf %104, %108 : vector<1x256xf32>
    %c8_53 = arith.constant 8 : index
    %c0_54 = arith.constant 0 : index
    %110 = vector.load %arg3[%c8_53, %c0_54] : memref<9x256xf32, #tpu.memory_space<vmem>>, vector<1x256xf32>
    %111 = arith.mulf %110, %106 : vector<1x256xf32>
    %112 = arith.addf %109, %111 : vector<1x256xf32>
    %cst_55 = arith.constant 0.000000e+00 : f32
    %113 = vector.broadcast %cst_55 : f32 to vector<1x256xf32>
    %114 = arith.subf %113, %112 : vector<1x256xf32>
    %115 = math.exp %114 : vector<1x256xf32>
    %cst_56 = arith.constant 1.000000e+00 : f32
    %116 = vector.broadcast %cst_56 : f32 to vector<1x256xf32>
    %117 = arith.addf %116, %115 : vector<1x256xf32>
    %cst_57 = arith.constant 1.000000e+00 : f32
    %118 = vector.broadcast %cst_57 : f32 to vector<1x256xf32>
    %119 = arith.divf %118, %117 : vector<1x256xf32>
    %c-2147483648_i32_58 = arith.constant -2147483648 : i32
    %120 = vector.broadcast %c-2147483648_i32_58 : i32 to vector<16x1xi32>
    %c2147483647_i32_59 = arith.constant 2147483647 : i32
    %121 = vector.broadcast %c2147483647_i32_59 : i32 to vector<16x1xi32>
    %cst_60 = arith.constant 2.250000e+02 : f32
    %c0_i32_61 = arith.constant 0 : i32
    %c32_i32_62 = arith.constant 32 : i32
    %122 = arith.addi %c0_i32_61, %c32_i32_62 : i32
    %c1_i32_63 = arith.constant 1 : i32
    %123:2 = scf.for %arg16 = %c0_i32_61 to %122 step %c1_i32_63 iter_args(%arg17 = %120, %arg18 = %121) -> (vector<16x1xi32>, vector<16x1xi32>)  : i32 {
      %c1_i32_111 = arith.constant 1 : i32
      %207 = vector.broadcast %c1_i32_111 : i32 to vector<16x1xi32>
      %208 = arith.shrsi %arg17, %207 : vector<16x1xi32>
      %c1_i32_112 = arith.constant 1 : i32
      %209 = vector.broadcast %c1_i32_112 : i32 to vector<16x1xi32>
      %210 = arith.shrsi %arg18, %209 : vector<16x1xi32>
      %211 = arith.addi %208, %210 : vector<16x1xi32>
      %212 = arith.ori %arg17, %arg18 : vector<16x1xi32>
      %c1_i32_113 = arith.constant 1 : i32
      %213 = vector.broadcast %c1_i32_113 : i32 to vector<16x1xi32>
      %214 = arith.andi %212, %213 : vector<16x1xi32>
      %215 = arith.addi %211, %214 : vector<16x1xi32>
      %216 = vector.broadcast %215 : vector<16x1xi32> to vector<16x256xi32>
      %217 = arith.cmpi sge, %9, %216 : vector<16x256xi32>
      %cst_114 = arith.constant 1.000000e+00 : f32
      %cst_115 = arith.constant 0.000000e+00 : f32
      %218 = vector.broadcast %cst_114 : f32 to vector<16x256xf32>
      %219 = vector.broadcast %cst_115 : f32 to vector<16x256xf32>
      %220 = arith.select %217, %218, %219 : vector<16x256xi1>, vector<16x256xf32>
      %cst_116 = arith.constant dense<0.000000e+00> : vector<16xf32>
      %221 = vector.multi_reduction <add>, %220, %cst_116 [1] : vector<16x256xf32> to vector<16xf32>
      %222 = vector.shape_cast %221 : vector<16xf32> to vector<16x1xf32>
      %223 = vector.broadcast %cst_60 : f32 to vector<16x1xf32>
      %224 = arith.cmpf oge, %222, %223 : vector<16x1xf32>
      %225 = arith.select %224, %215, %arg17 : vector<16x1xi1>, vector<16x1xi32>
      %c1_i32_117 = arith.constant 1 : i32
      %226 = vector.broadcast %c1_i32_117 : i32 to vector<16x1xi32>
      %227 = arith.subi %215, %226 : vector<16x1xi32>
      %228 = arith.select %224, %arg18, %227 : vector<16x1xi1>, vector<16x1xi32>
      scf.yield %225, %228 : vector<16x1xi32>, vector<16x1xi32>
    }
    %c0_i32_64 = arith.constant 0 : i32
    %124 = vector.broadcast %c0_i32_64 : i32 to vector<16x1xi32>
    %125 = arith.cmpi slt, %123#0, %124 : vector<16x1xi32>
    %c2147483647_i32_65 = arith.constant 2147483647 : i32
    %c0_i32_66 = arith.constant 0 : i32
    %126 = vector.broadcast %c2147483647_i32_65 : i32 to vector<16x1xi32>
    %127 = vector.broadcast %c0_i32_66 : i32 to vector<16x1xi32>
    %128 = arith.select %125, %126, %127 : vector<16x1xi1>, vector<16x1xi32>
    %129 = arith.xori %123#0, %128 : vector<16x1xi32>
    %130 = tpu.bitcast %129 : vector<16x1xi32> -> vector<16x1xf32>
    %131 = vector.broadcast %123#0 : vector<16x1xi32> to vector<16x256xi32>
    %132 = arith.cmpi sgt, %9, %131 : vector<16x256xi32>
    %cst_67 = arith.constant 1.000000e+00 : f32
    %cst_68 = arith.constant 0.000000e+00 : f32
    %133 = vector.broadcast %cst_67 : f32 to vector<16x256xf32>
    %134 = vector.broadcast %cst_68 : f32 to vector<16x256xf32>
    %135 = arith.select %132, %133, %134 : vector<16x256xi1>, vector<16x256xf32>
    %cst_69 = arith.constant dense<0.000000e+00> : vector<16xf32>
    %136 = vector.multi_reduction <add>, %135, %cst_69 [1] : vector<16x256xf32> to vector<16xf32>
    %137 = vector.shape_cast %136 : vector<16xf32> to vector<16x1xf32>
    %cst_70 = arith.constant 0.000000e+00 : f32
    %138 = vector.broadcast %cst_70 : f32 to vector<16x256xf32>
    %139 = arith.select %132, %1, %138 : vector<16x256xi1>, vector<16x256xf32>
    %cst_71 = arith.constant dense<0.000000e+00> : vector<16xf32>
    %140 = vector.multi_reduction <add>, %139, %cst_71 [1] : vector<16x256xf32> to vector<16xf32>
    %141 = vector.shape_cast %140 : vector<16xf32> to vector<16x1xf32>
    %cst_72 = arith.constant 2.250000e+02 : f32
    %142 = vector.broadcast %cst_72 : f32 to vector<16x1xf32>
    %143 = arith.subf %142, %137 : vector<16x1xf32>
    %144 = arith.mulf %143, %130 : vector<16x1xf32>
    %145 = arith.addf %141, %144 : vector<16x1xf32>
    %cst_73 = arith.constant 0.00444444455 : f32
    %146 = vector.broadcast %cst_73 : f32 to vector<16x1xf32>
    %147 = arith.mulf %145, %146 : vector<16x1xf32>
    %c0_74 = arith.constant 0 : index
    %c0_75 = arith.constant 0 : index
    %148 = vector.load %arg4[%c0_74, %c0_75] : memref<8x16xf32, #tpu.memory_space<vmem>>, vector<8x16xf32>
    %cst_76 = arith.constant dense<0.000000e+00> : vector<8x1xf32>
    %149 = tpu.matmul %148, %147, %cst_76 {dimension_numbers = #tpu.dot_dimension_numbers<[1], [0], [0], [1], [0, 0, 1, 1], [], []>} : vector<8x16xf32>, vector<16x1xf32>, vector<8x1xf32> -> vector<8x1xf32>
    %c0_77 = arith.constant 0 : index
    %c0_78 = arith.constant 0 : index
    %150 = vector.load %arg5[%c0_77, %c0_78] : memref<16x8xf32, #tpu.memory_space<vmem>>, vector<16x8xf32>
    %cst_79 = arith.constant dense<0.000000e+00> : vector<16x1xf32>
    %151 = tpu.matmul %150, %149, %cst_79 {dimension_numbers = #tpu.dot_dimension_numbers<[1], [0], [0], [1], [0, 0, 1, 1], [], []>} : vector<16x8xf32>, vector<8x1xf32>, vector<16x1xf32> -> vector<16x1xf32>
    %cst_80 = arith.constant 0.000000e+00 : f32
    %152 = vector.broadcast %cst_80 : f32 to vector<16x1xf32>
    %153 = arith.subf %152, %151 : vector<16x1xf32>
    %154 = math.exp %153 : vector<16x1xf32>
    %cst_81 = arith.constant 1.000000e+00 : f32
    %155 = vector.broadcast %cst_81 : f32 to vector<16x1xf32>
    %156 = arith.addf %155, %154 : vector<16x1xf32>
    %cst_82 = arith.constant 1.000000e+00 : f32
    %157 = vector.broadcast %cst_82 : f32 to vector<16x1xf32>
    %158 = arith.divf %157, %156 : vector<16x1xf32>
    %159 = vector.broadcast %158 : vector<16x1xf32> to vector<16x256xf32>
    %160 = arith.mulf %1, %159 : vector<16x256xf32>
    %161 = vector.broadcast %119 : vector<1x256xf32> to vector<16x256xf32>
    %162 = arith.mulf %1, %161 : vector<16x256xf32>
    %163 = arith.addf %162, %160 : vector<16x256xf32>
    %c0_83 = arith.constant 0 : index
    %c0_84 = arith.constant 0 : index
    %164 = vector.load %arg6[%c0_83, %c0_84] : memref<16x16xbf16, #tpu.memory_space<vmem>>, vector<16x16xbf16>
    %cst_85 = arith.constant dense<0.000000e+00> : vector<16x256xf32>
    %165 = tpu.matmul %164, %2, %cst_85 {dimension_numbers = #tpu.dot_dimension_numbers<[1], [0], [0], [1], [0, 0, 1, 1], [], []>} : vector<16x16xbf16>, vector<16x256xbf16>, vector<16x256xf32> -> vector<16x256xf32>
    %c0_86 = arith.constant 0 : index
    %c0_87 = arith.constant 0 : index
    %166 = vector.load %arg7[%c0_86, %c0_87] : memref<16x1xf32, #tpu.memory_space<vmem>>, vector<16x1xf32>
    %167 = vector.broadcast %166 : vector<16x1xf32> to vector<16x256xf32>
    %168 = arith.mulf %165, %167 : vector<16x256xf32>
    %c0_88 = arith.constant 0 : index
    %c0_89 = arith.constant 0 : index
    %169 = vector.load %arg8[%c0_88, %c0_89] : memref<16x1xf32, #tpu.memory_space<vmem>>, vector<16x1xf32>
    %170 = vector.broadcast %169 : vector<16x1xf32> to vector<16x256xf32>
    %171 = arith.addf %168, %170 : vector<16x256xf32>
    %172 = arith.truncf %163 : vector<16x256xf32> to vector<16x256xbf16>
    %c0_90 = arith.constant 0 : index
    %c0_91 = arith.constant 0 : index
    %173 = vector.load %arg9[%c0_90, %c0_91] : memref<4x16xbf16, #tpu.memory_space<vmem>>, vector<4x16xbf16>
    %cst_92 = arith.constant dense<0.000000e+00> : vector<4x256xf32>
    %174 = tpu.matmul %173, %172, %cst_92 {dimension_numbers = #tpu.dot_dimension_numbers<[1], [0], [0], [1], [0, 0, 1, 1], [], []>} : vector<4x16xbf16>, vector<16x256xbf16>, vector<4x256xf32> -> vector<4x256xf32>
    %c0_93 = arith.constant 0 : index
    %c0_94 = arith.constant 0 : index
    %175 = vector.load %arg10[%c0_93, %c0_94] : memref<4x16xbf16, #tpu.memory_space<vmem>>, vector<4x16xbf16>
    %cst_95 = arith.constant dense<0.000000e+00> : vector<4x256xf32>
    %176 = tpu.matmul %175, %2, %cst_95 {dimension_numbers = #tpu.dot_dimension_numbers<[1], [0], [0], [1], [0, 0, 1, 1], [], []>} : vector<4x16xbf16>, vector<16x256xbf16>, vector<4x256xf32> -> vector<4x256xf32>
    %177 = arith.addf %174, %176 : vector<4x256xf32>
    %c0_96 = arith.constant 0 : index
    %c0_97 = arith.constant 0 : index
    %178 = vector.load %arg11[%c0_96, %c0_97] : memref<4x1xf32, #tpu.memory_space<vmem>>, vector<4x1xf32>
    %179 = vector.broadcast %178 : vector<4x1xf32> to vector<4x256xf32>
    %180 = arith.mulf %177, %179 : vector<4x256xf32>
    %c0_98 = arith.constant 0 : index
    %c0_99 = arith.constant 0 : index
    %181 = vector.load %arg12[%c0_98, %c0_99] : memref<4x1xf32, #tpu.memory_space<vmem>>, vector<4x1xf32>
    %182 = vector.broadcast %181 : vector<4x1xf32> to vector<4x256xf32>
    %183 = arith.addf %180, %182 : vector<4x256xf32>
    %cst_100 = arith.constant 0.000000e+00 : f32
    %184 = vector.broadcast %cst_100 : f32 to vector<4x256xf32>
    %185 = arith.maximumf %183, %184 : vector<4x256xf32>
    %c0_101 = arith.constant 0 : index
    %c0_102 = arith.constant 0 : index
    %186 = vector.load %arg13[%c0_101, %c0_102] : memref<16x4xbf16, #tpu.memory_space<vmem>>, vector<16x4xbf16>
    %187 = arith.truncf %185 : vector<4x256xf32> to vector<4x256xbf16>
    %cst_103 = arith.constant dense<0.000000e+00> : vector<16x256xf32>
    %188 = tpu.matmul %186, %187, %cst_103 {dimension_numbers = #tpu.dot_dimension_numbers<[1], [0], [0], [1], [0, 0, 1, 1], [], []>} : vector<16x4xbf16>, vector<4x256xbf16>, vector<16x256xf32> -> vector<16x256xf32>
    %c0_104 = arith.constant 0 : index
    %c0_105 = arith.constant 0 : index
    %189 = vector.load %arg14[%c0_104, %c0_105] : memref<16x1xf32, #tpu.memory_space<vmem>>, vector<16x1xf32>
    %190 = vector.broadcast %189 : vector<16x1xf32> to vector<16x256xf32>
    %191 = arith.addf %188, %190 : vector<16x256xf32>
    %cst_106 = arith.constant dense<0xFF800000> : vector<16xf32>
    %192 = vector.multi_reduction <maximumf>, %191, %cst_106 [1] : vector<16x256xf32> to vector<16xf32>
    %193 = vector.shape_cast %192 : vector<16xf32> to vector<16x1xf32>
    %194 = vector.broadcast %193 : vector<16x1xf32> to vector<16x256xf32>
    %195 = arith.subf %191, %194 : vector<16x256xf32>
    %196 = math.exp %195 : vector<16x256xf32>
    %cst_107 = arith.constant dense<0.000000e+00> : vector<16xf32>
    %197 = vector.multi_reduction <add>, %196, %cst_107 [1] : vector<16x256xf32> to vector<16xf32>
    %198 = vector.shape_cast %197 : vector<16xf32> to vector<16x1xf32>
    %199 = tpu.reciprocal %198 {approx = true} : vector<16x1xf32> -> vector<16x1xf32>
    %200 = vector.broadcast %199 : vector<16x1xf32> to vector<16x256xf32>
    %201 = arith.mulf %196, %200 : vector<16x256xf32>
    %202 = arith.mulf %201, %171 : vector<16x256xf32>
    %203 = arith.addf %163, %202 : vector<16x256xf32>
    %c0_108 = arith.constant 0 : index
    %c0_109 = arith.constant 0 : index
    %c0_110 = arith.constant 0 : index
    %204 = vector.load %arg15[%c0_108, %c0_109, %c0_110] : memref<1x16x256xf32, #tpu.memory_space<vmem>>, vector<1x16x256xf32>
    %205 = vector.shape_cast %204 : vector<1x16x256xf32> to vector<16x256xf32>
    %206 = vector.shape_cast %203 : vector<16x256xf32> to vector<1x16x256xf32>
    tpu.vector_store %arg15[%c0_108, %c0_109, %c0_110], %206 {strides = array<i32>} : memref<1x16x256xf32, #tpu.memory_space<vmem>>, vector<1x16x256xf32>,
    return
  }
  func.func @transform_0(%arg0: i32) -> (i32, i32, i32) {
    %c0_i32 = arith.constant 0 : i32
    %c0_i32_0 = arith.constant 0 : i32
    %c0_i32_1 = arith.constant 0 : i32
    return %arg0, %c0_i32, %c0_i32_0 : i32, i32, i32
  }
  func.func @transform_1(%arg0: i32) -> (i32, i32) {
    %c0_i32 = arith.constant 0 : i32
    %c0_i32_0 = arith.constant 0 : i32
    %c0_i32_1 = arith.constant 0 : i32
    return %c0_i32, %c0_i32_0 : i32, i32
  }
  func.func @transform_2(%arg0: i32) -> (i32, i32) {
    %c0_i32 = arith.constant 0 : i32
    %c0_i32_0 = arith.constant 0 : i32
    %c0_i32_1 = arith.constant 0 : i32
    return %c0_i32, %c0_i32_0 : i32, i32
  }
  func.func @transform_3(%arg0: i32) -> (i32, i32) {
    %c0_i32 = arith.constant 0 : i32
    %c0_i32_0 = arith.constant 0 : i32
    %c0_i32_1 = arith.constant 0 : i32
    return %c0_i32, %c0_i32_0 : i32, i32
  }
  func.func @transform_4(%arg0: i32) -> (i32, i32) {
    %c0_i32 = arith.constant 0 : i32
    %c0_i32_0 = arith.constant 0 : i32
    %c0_i32_1 = arith.constant 0 : i32
    return %c0_i32, %c0_i32_0 : i32, i32
  }
  func.func @transform_5(%arg0: i32) -> (i32, i32) {
    %c0_i32 = arith.constant 0 : i32
    %c0_i32_0 = arith.constant 0 : i32
    %c0_i32_1 = arith.constant 0 : i32
    return %c0_i32, %c0_i32_0 : i32, i32
  }
  func.func @transform_6(%arg0: i32) -> (i32, i32) {
    %c0_i32 = arith.constant 0 : i32
    %c0_i32_0 = arith.constant 0 : i32
    %c0_i32_1 = arith.constant 0 : i32
    return %c0_i32, %c0_i32_0 : i32, i32
  }
  func.func @transform_7(%arg0: i32) -> (i32, i32) {
    %c0_i32 = arith.constant 0 : i32
    %c0_i32_0 = arith.constant 0 : i32
    %c0_i32_1 = arith.constant 0 : i32
    return %c0_i32, %c0_i32_0 : i32, i32
  }
  func.func @transform_8(%arg0: i32) -> (i32, i32) {
    %c0_i32 = arith.constant 0 : i32
    %c0_i32_0 = arith.constant 0 : i32
    %c0_i32_1 = arith.constant 0 : i32
    return %c0_i32, %c0_i32_0 : i32, i32
  }
  func.func @transform_9(%arg0: i32) -> (i32, i32) {
    %c0_i32 = arith.constant 0 : i32
    %c0_i32_0 = arith.constant 0 : i32
    %c0_i32_1 = arith.constant 0 : i32
    return %c0_i32, %c0_i32_0 : i32, i32
  }
  func.func @transform_10(%arg0: i32) -> (i32, i32) {
    %c0_i32 = arith.constant 0 : i32
    %c0_i32_0 = arith.constant 0 : i32
    %c0_i32_1 = arith.constant 0 : i32
    return %c0_i32, %c0_i32_0 : i32, i32
  }
  func.func @transform_11(%arg0: i32) -> (i32, i32) {
    %c0_i32 = arith.constant 0 : i32
    %c0_i32_0 = arith.constant 0 : i32
    %c0_i32_1 = arith.constant 0 : i32
    return %c0_i32, %c0_i32_0 : i32, i32
  }
  func.func @transform_12(%arg0: i32) -> (i32, i32) {
    %c0_i32 = arith.constant 0 : i32
    %c0_i32_0 = arith.constant 0 : i32
    %c0_i32_1 = arith.constant 0 : i32
    return %c0_i32, %c0_i32_0 : i32, i32
  }
  func.func @transform_13(%arg0: i32) -> (i32, i32) {
    %c0_i32 = arith.constant 0 : i32
    %c0_i32_0 = arith.constant 0 : i32
    %c0_i32_1 = arith.constant 0 : i32
    return %c0_i32, %c0_i32_0 : i32, i32
  }
  func.func @transform_14(%arg0: i32) -> (i32, i32, i32) {
    %c0_i32 = arith.constant 0 : i32
    %c0_i32_0 = arith.constant 0 : i32
    %c0_i32_1 = arith.constant 0 : i32
    return %arg0, %c0_i32, %c0_i32_0 : i32, i32, i32
  }
}

</mosaic_0001>

<llo_original>
// kernel: tpu_custom_call.1
$region0: #{tpu_custom_call.1}
  #allocation0 [shape = 'u32[]', space=smem, size = 0x4, offset = 0x4, fixed_abs, tag = 'smem constant byte address 0x4 - core index']
  #allocation1 [shape = 'u32[72,128]{1,0:T(1,128)}', space=vmem, size = 0x9000, scoped, tag = 'internal scratch']
  %s0 = inlined_call_operand.hbm [shape: f32[2,16,256], index: 0, kind: input, shape index: {}]
  %s1 = inlined_call_operand.vmem [shape: f32[9,256], index: 1, kind: input, shape index: {}]
  %s2 = inlined_call_operand.vmem [shape: f32[9,256], index: 2, kind: input, shape index: {}]
  %s3 = inlined_call_operand.vmem [shape: f32[8,16], index: 3, kind: input, shape index: {}]
  %s4 = inlined_call_operand.vmem [shape: f32[16,8], index: 4, kind: input, shape index: {}]
  %s5 = inlined_call_operand.vmem [shape: bf16[16,16], index: 5, kind: input, shape index: {}]
  %s6 = inlined_call_operand.vmem [shape: f32[16,1], index: 6, kind: input, shape index: {}]
  %s7 = inlined_call_operand.vmem [shape: f32[16,1], index: 7, kind: input, shape index: {}]
  %s8 = inlined_call_operand.vmem [shape: bf16[4,16], index: 8, kind: input, shape index: {}]
  %s9 = inlined_call_operand.vmem [shape: bf16[4,16], index: 9, kind: input, shape index: {}]
  %s10 = inlined_call_operand.vmem [shape: f32[4,1], index: 10, kind: input, shape index: {}]
  %s11 = inlined_call_operand.vmem [shape: f32[4,1], index: 11, kind: input, shape index: {}]
  %s12 = inlined_call_operand.vmem [shape: bf16[16,4], index: 12, kind: input, shape index: {}]
  %s13 = inlined_call_operand.vmem [shape: f32[16,1], index: 13, kind: input, shape index: {}]
  %s14 = inlined_call_operand.hbm [shape: f32[2,16,256], index: 14, kind: output, shape index: {}]
  %s15 = sld [smem:[#allocation0]]
  $region107: #{tpu_custom_call.1} parent=0
    _
  %s17 = ssub.s32 1, %s15
  %s18 = scalar_select 0, %s17, %s15
  $region1: #{tpu_custom_call.1} parent=0
    #allocation2 [shape = 'u8[32768]{0}', space=vmem, size = 0x8000, scoped, tag = 'input window, operand 0']
    #allocation3 [shape = 's32[2]{0}', space=sflag, size = 0x8, scoped, tag = 'scoped memory for tpu_custom_call.1']
    #allocation4 [shape = 's32[2]{0}', space=sflag, size = 0x8, scoped, tag = 'scoped memory for tpu_custom_call.1']
    #allocation5 [shape = 'u8[32768]{0}', space=vmem, size = 0x8000, scoped, tag = 'output window, operand 0']
    %19 = vsyncpa [#allocation3], 0
    %s20 = scalar_lea.sflag [#allocation3], 1
    %21 = vsyncpa %s20, 0
    %22 = vsyncpa [#allocation4], 0
    %s23 = scalar_lea.sflag [#allocation4], 1
    %24 = vsyncpa %s23, 0
    loop: start=0, step=1, limit=4
    $region2: #{tpu_custom_call.1} parent=1 // loop_pre_header
      _
    $region3: #{tpu_custom_call.1} parent=1 // loop_header
      %s26 = sphi 0, %s30
      %p27 = scmp.ge.s32.totalorder %s26, 4
      %s36 = sphi 0, %s38
      %s39 = sphi 0, %s36
      %s40 = sphi 0, %s39
      %s56 = sphi 0, %s40
      %s60 = sphi 0, %s60
      %s62 = sphi 0, %s60
      %s63 = sphi 0, %s62
      %s77 = sphi 0, %s63
      %s81 = sphi 0, %s81
      %s83 = sphi 0, %s81
      %s84 = sphi 0, %s83
      %s98 = sphi 0, %s84
      %s102 = sphi 0, %s102
      %s104 = sphi 0, %s102
      %s105 = sphi 0, %s104
      %s119 = sphi 0, %s105
      %s123 = sphi 0, %s123
      %s125 = sphi 0, %s123
      %s126 = sphi 0, %s125
      %s140 = sphi 0, %s126
      %s144 = sphi 0, %s144
      %s146 = sphi 0, %s144
      %s147 = sphi 0, %s146
      %s161 = sphi 0, %s147
      %s165 = sphi 0, %s165
      %s167 = sphi 0, %s165
      %s168 = sphi 0, %s167
      %s182 = sphi 0, %s168
      %s186 = sphi 0, %s186
      %s188 = sphi 0, %s186
      %s189 = sphi 0, %s188
      %s203 = sphi 0, %s189
      %s207 = sphi 0, %s207
      %s209 = sphi 0, %s207
      %s210 = sphi 0, %s209
      %s224 = sphi 0, %s210
      %s228 = sphi 0, %s228
      %s230 = sphi 0, %s228
      %s231 = sphi 0, %s230
      %s245 = sphi 0, %s231
      %s249 = sphi 0, %s249
      %s251 = sphi 0, %s249
      %s252 = sphi 0, %s251
      %s266 = sphi 0, %s252
      %s270 = sphi 0, %s270
      %s272 = sphi 0, %s270
      %s273 = sphi 0, %s272
      %s287 = sphi 0, %s273
      %s291 = sphi 0, %s291
      %s293 = sphi 0, %s291
      %s294 = sphi 0, %s293
      %s308 = sphi 0, %s294
      %s312 = sphi 0, %s312
      %s314 = sphi 0, %s312
      %s315 = sphi 0, %s314
      %s329 = sphi 0, %s315
      %s335 = sphi 0, %s337
      %s338 = sphi 0, %s335
      %s339 = sphi 0, %s338
      %s355 = sphi 0, %s339
    $region4: #{tpu_custom_call.1} parent=1 // loop_header_branch
      %29 = sbr.rel (%p27) target = $region8
    $region5: #{tpu_custom_call.1} parent=1 // loop_body
      %s31 = ssub.s32 %s26, 1
      %s32 = ssub.s32 %s26, 2
      %s33 = sadd.s32 %s26, 1
      %s34 = ssub.s32 %s26, %s33
      %p35 = scmp.eq.s32.totalorder %s34, 0
      %s37 = sadd.s32 %s36, 1
      %s38 = scalar_select %p35, %s36, %s37
      %p41 = pneg %p35
      %p42 = scmp.eq.s32.totalorder %s26, 1
      %p43 = por %p41, %p42
      %p44 = scmp.ne.s32.totalorder %s36, %s39
      %p45 = scmp.eq.s32.totalorder %s26, 0
      %p46 = por %p44, %p45
      %p47 = scmp.ne.s32.totalorder %s36, %s39
      %p48 = scmp.eq.s32.totalorder %s31, 1
      %p49 = por %p47, %p48
      %p50 = scmp.ne.s32.totalorder %s39, %s40
      %p51 = scmp.eq.s32.totalorder %s31, 0
      %p52 = por %p50, %p51
      %p53 = scmp.ne.s32.totalorder %s39, %s40
      %p54 = scmp.eq.s32.totalorder %s32, 1
      %p55 = por %p53, %p54
      %p57 = scmp.ne.s32.totalorder %s40, %s56
      %p58 = scmp.eq.s32.totalorder %s32, 0
      %p59 = por %p57, %p58
      %s61 = sadd.s32 %s60, 1
      %p64 = scmp.eq.s32.totalorder %s26, 1
      %p65 = scmp.ne.s32.totalorder %s60, %s62
      %p66 = scmp.eq.s32.totalorder %s26, 0
      %p67 = por %p65, %p66
      %p68 = scmp.ne.s32.totalorder %s60, %s62
      %p69 = scmp.eq.s32.totalorder %s31, 1
      %p70 = por %p68, %p69
      %p71 = scmp.ne.s32.totalorder %s62, %s63
      %p72 = scmp.eq.s32.totalorder %s31, 0
      %p73 = por %p71, %p72
      %p74 = scmp.ne.s32.totalorder %s62, %s63
      %p75 = scmp.eq.s32.totalorder %s32, 1
      %p76 = por %p74, %p75
      %p78 = scmp.ne.s32.totalorder %s63, %s77
      %p79 = scmp.eq.s32.totalorder %s32, 0
      %p80 = por %p78, %p79
      %s82 = sadd.s32 %s81, 1
      %p85 = scmp.eq.s32.totalorder %s26, 1
      %p86 = scmp.ne.s32.totalorder %s81, %s83
      %p87 = scmp.eq.s32.totalorder %s26, 0
      %p88 = por %p86, %p87
      %p89 = scmp.ne.s32.totalorder %s81, %s83
      %p90 = scmp.eq.s32.totalorder %s31, 1
      %p91 = por %p89, %p90
      %p92 = scmp.ne.s32.totalorder %s83, %s84
      %p93 = scmp.eq.s32.totalorder %s31, 0
      %p94 = por %p92, %p93
      %p95 = scmp.ne.s32.totalorder %s83, %s84
      %p96 = scmp.eq.s32.totalorder %s32, 1
      %p97 = por %p95, %p96
      %p99 = scmp.ne.s32.totalorder %s84, %s98
      %p100 = scmp.eq.s32.totalorder %s32, 0
      %p101 = por %p99, %p100
      %s103 = sadd.s32 %s102, 1
      %p106 = scmp.eq.s32.totalorder %s26, 1
      %p107 = scmp.ne.s32.totalorder %s102, %s104
      %p108 = scmp.eq.s32.totalorder %s26, 0
      %p109 = por %p107, %p108
      %p110 = scmp.ne.s32.totalorder %s102, %s104
      %p111 = scmp.eq.s32.totalorder %s31, 1
      %p112 = por %p110, %p111
      %p113 = scmp.ne.s32.totalorder %s104, %s105
      %p114 = scmp.eq.s32.totalorder %s31, 0
      %p115 = por %p113, %p114
      %p116 = scmp.ne.s32.totalorder %s104, %s105
      %p117 = scmp.eq.s32.totalorder %s32, 1
      %p118 = por %p116, %p117
      %p120 = scmp.ne.s32.totalorder %s105, %s119
      %p121 = scmp.eq.s32.totalorder %s32, 0
      %p122 = por %p120, %p121
      %s124 = sadd.s32 %s123, 1
      %p127 = scmp.eq.s32.totalorder %s26, 1
      %p128 = scmp.ne.s32.totalorder %s123, %s125
      %p129 = scmp.eq.s32.totalorder %s26, 0
      %p130 = por %p128, %p129
      %p131 = scmp.ne.s32.totalorder %s123, %s125
      %p132 = scmp.eq.s32.totalorder %s31, 1
      %p133 = por %p131, %p132
      %p134 = scmp.ne.s32.totalorder %s125, %s126
      %p135 = scmp.eq.s32.totalorder %s31, 0
      %p136 = por %p134, %p135
      %p137 = scmp.ne.s32.totalorder %s125, %s126
      %p138 = scmp.eq.s32.totalorder %s32, 1
      %p139 = por %p137, %p138
      %p141 = scmp.ne.s32.totalorder %s126, %s140
      %p142 = scmp.eq.s32.totalorder %s32, 0
      %p143 = por %p141, %p142
      %s145 = sadd.s32 %s144, 1
      %p148 = scmp.eq.s32.totalorder %s26, 1
      %p149 = scmp.ne.s32.totalorder %s144, %s146
      %p150 = scmp.eq.s32.totalorder %s26, 0
      %p151 = por %p149, %p150
      %p152 = scmp.ne.s32.totalorder %s144, %s146
      %p153 = scmp.eq.s32.totalorder %s31, 1
      %p154 = por %p152, %p153
      %p155 = scmp.ne.s32.totalorder %s146, %s147
      %p156 = scmp.eq.s32.totalorder %s31, 0
      %p157 = por %p155, %p156
      %p158 = scmp.ne.s32.totalorder %s146, %s147
      %p159 = scmp.eq.s32.totalorder %s32, 1
      %p160 = por %p158, %p159
      %p162 = scmp.ne.s32.totalorder %s147, %s161
      %p163 = scmp.eq.s32.totalorder %s32, 0
      %p164 = por %p162, %p163
      %s166 = sadd.s32 %s165, 1
      %p169 = scmp.eq.s32.totalorder %s26, 1
      %p170 = scmp.ne.s32.totalorder %s165, %s167
      %p171 = scmp.eq.s32.totalorder %s26, 0
      %p172 = por %p170, %p171
      %p173 = scmp.ne.s32.totalorder %s165, %s167
      %p174 = scmp.eq.s32.totalorder %s31, 1
      %p175 = por %p173, %p174
      %p176 = scmp.ne.s32.totalorder %s167, %s168
      %p177 = scmp.eq.s32.totalorder %s31, 0
      %p178 = por %p176, %p177
      %p179 = scmp.ne.s32.totalorder %s167, %s168
      %p180 = scmp.eq.s32.totalorder %s32, 1
      %p181 = por %p179, %p180
      %p183 = scmp.ne.s32.totalorder %s168, %s182
      %p184 = scmp.eq.s32.totalorder %s32, 0
      %p185 = por %p183, %p184
      %s187 = sadd.s32 %s186, 1
      %p190 = scmp.eq.s32.totalorder %s26, 1
      %p191 = scmp.ne.s32.totalorder %s186, %s188
      %p192 = scmp.eq.s32.totalorder %s26, 0
      %p193 = por %p191, %p192
      %p194 = scmp.ne.s32.totalorder %s186, %s188
      %p195 = scmp.eq.s32.totalorder %s31, 1
      %p196 = por %p194, %p195
      %p197 = scmp.ne.s32.totalorder %s188, %s189
      %p198 = scmp.eq.s32.totalorder %s31, 0
      %p199 = por %p197, %p198
      %p200 = scmp.ne.s32.totalorder %s188, %s189
      %p201 = scmp.eq.s32.totalorder %s32, 1
      %p202 = por %p200, %p201
      %p204 = scmp.ne.s32.totalorder %s189, %s203
      %p205 = scmp.eq.s32.totalorder %s32, 0
      %p206 = por %p204, %p205
      %s208 = sadd.s32 %s207, 1
      %p211 = scmp.eq.s32.totalorder %s26, 1
      %p212 = scmp.ne.s32.totalorder %s207, %s209
      %p213 = scmp.eq.s32.totalorder %s26, 0
      %p214 = por %p212, %p213
      %p215 = scmp.ne.s32.totalorder %s207, %s209
      %p216 = scmp.eq.s32.totalorder %s31, 1
      %p217 = por %p215, %p216
      %p218 = scmp.ne.s32.totalorder %s209, %s210
      %p219 = scmp.eq.s32.totalorder %s31, 0
      %p220 = por %p218, %p219
      %p221 = scmp.ne.s32.totalorder %s209, %s210
      %p222 = scmp.eq.s32.totalorder %s32, 1
      %p223 = por %p221, %p222
      %p225 = scmp.ne.s32.totalorder %s210, %s224
      %p226 = scmp.eq.s32.totalorder %s32, 0
      %p227 = por %p225, %p226
      %s229 = sadd.s32 %s228, 1
      %p232 = scmp.eq.s32.totalorder %s26, 1
      %p233 = scmp.ne.s32.totalorder %s228, %s230
      %p234 = scmp.eq.s32.totalorder %s26, 0
      %p235 = por %p233, %p234
      %p236 = scmp.ne.s32.totalorder %s228, %s230
      %p237 = scmp.eq.s32.totalorder %s31, 1
      %p238 = por %p236, %p237
      %p239 = scmp.ne.s32.totalorder %s230, %s231
      %p240 = scmp.eq.s32.totalorder %s31, 0
      %p241 = por %p239, %p240
      %p242 = scmp.ne.s32.totalorder %s230, %s231
      %p243 = scmp.eq.s32.totalorder %s32, 1
      %p244 = por %p242, %p243
      %p246 = scmp.ne.s32.totalorder %s231, %s245
      %p247 = scmp.eq.s32.totalorder %s32, 0
      %p248 = por %p246, %p247
      %s250 = sadd.s32 %s249, 1
      %p253 = scmp.eq.s32.totalorder %s26, 1
      %p254 = scmp.ne.s32.totalorder %s249, %s251
      %p255 = scmp.eq.s32.totalorder %s26, 0
      %p256 = por %p254, %p255
      %p257 = scmp.ne.s32.totalorder %s249, %s251
      %p258 = scmp.eq.s32.totalorder %s31, 1
      %p259 = por %p257, %p258
      %p260 = scmp.ne.s32.totalorder %s251, %s252
      %p261 = scmp.eq.s32.totalorder %s31, 0
      %p262 = por %p260, %p261
      %p263 = scmp.ne.s32.totalorder %s251, %s252
      %p264 = scmp.eq.s32.totalorder %s32, 1
      %p265 = por %p263, %p264
      %p267 = scmp.ne.s32.totalorder %s252, %s266
      %p268 = scmp.eq.s32.totalorder %s32, 0
      %p269 = por %p267, %p268
      %s271 = sadd.s32 %s270, 1
      %p274 = scmp.eq.s32.totalorder %s26, 1
      %p275 = scmp.ne.s32.totalorder %s270, %s272
      %p276 = scmp.eq.s32.totalorder %s26, 0
      %p277 = por %p275, %p276
      %p278 = scmp.ne.s32.totalorder %s270, %s272
      %p279 = scmp.eq.s32.totalorder %s31, 1
      %p280 = por %p278, %p279
      %p281 = scmp.ne.s32.totalorder %s272, %s273
      %p282 = scmp.eq.s32.totalorder %s31, 0
      %p283 = por %p281, %p282
      %p284 = scmp.ne.s32.totalorder %s272, %s273
      %p285 = scmp.eq.s32.totalorder %s32, 1
      %p286 = por %p284, %p285
      %p288 = scmp.ne.s32.totalorder %s273, %s287
      %p289 = scmp.eq.s32.totalorder %s32, 0
      %p290 = por %p288, %p289
      %s292 = sadd.s32 %s291, 1
      %p295 = scmp.eq.s32.totalorder %s26, 1
      %p296 = scmp.ne.s32.totalorder %s291, %s293
      %p297 = scmp.eq.s32.totalorder %s26, 0
      %p298 = por %p296, %p297
      %p299 = scmp.ne.s32.totalorder %s291, %s293
      %p300 = scmp.eq.s32.totalorder %s31, 1
      %p301 = por %p299, %p300
      %p302 = scmp.ne.s32.totalorder %s293, %s294
      %p303 = scmp.eq.s32.totalorder %s31, 0
      %p304 = por %p302, %p303
      %p305 = scmp.ne.s32.totalorder %s293, %s294
      %p306 = scmp.eq.s32.totalorder %s32, 1
      %p307 = por %p305, %p306
      %p309 = scmp.ne.s32.totalorder %s294, %s308
      %p310 = scmp.eq.s32.totalorder %s32, 0
      %p311 = por %p309, %p310
      %s313 = sadd.s32 %s312, 1
      %p316 = scmp.eq.s32.totalorder %s26, 1
      %p317 = scmp.ne.s32.totalorder %s312, %s314
      %p318 = scmp.eq.s32.totalorder %s26, 0
      %p319 = por %p317, %p318
      %p320 = scmp.ne.s32.totalorder %s312, %s314
      %p321 = scmp.eq.s32.totalorder %s31, 1
      %p322 = por %p320, %p321
      %p323 = scmp.ne.s32.totalorder %s314, %s315
      %p324 = scmp.eq.s32.totalorder %s31, 0
      %p325 = por %p323, %p324
      %p326 = scmp.ne.s32.totalorder %s314, %s315
      %p327 = scmp.eq.s32.totalorder %s32, 1
      %p328 = por %p326, %p327
      %p330 = scmp.ne.s32.totalorder %s315, %s329
      %p331 = scmp.eq.s32.totalorder %s32, 0
      %p332 = por %p330, %p331
      %s333 = ssub.s32 %s26, %s33
      %p334 = scmp.eq.s32.totalorder %s333, 0
      %s336 = sadd.s32 %s335, 1
      %s337 = scalar_select %p334, %s335, %s336
      %p340 = pneg %p334
      %p341 = scmp.eq.s32.totalorder %s26, 1
      %p342 = por %p340, %p341
      %p343 = scmp.ne.s32.totalorder %s335, %s338
      %p344 = scmp.eq.s32.totalorder %s26, 0
      %p345 = por %p343, %p344
      %p346 = scmp.ne.s32.totalorder %s335, %s338
      %p347 = scmp.eq.s32.totalorder %s31, 1
      %p348 = por %p346, %p347
      %p349 = scmp.ne.s32.totalorder %s338, %s339
      %p350 = scmp.eq.s32.totalorder %s31, 0
      %p351 = por %p349, %p350
      %p352 = scmp.ne.s32.totalorder %s338, %s339
      %p353 = scmp.eq.s32.totalorder %s32, 1
      %p354 = por %p352, %p353
      %p356 = scmp.ne.s32.totalorder %s339, %s355
      %p357 = scmp.eq.s32.totalorder %s32, 0
      %p358 = por %p356, %p357
      %p359 = scmp.le.s32.totalorder 1, %s26
      %p360 = scmp.lt.s32.totalorder %s26, 3
      %p361 = pnand %p359, %p360
      %p362 = pneg %p361
      // Predicated region
      $region9: #{tpu_custom_call.1} parent=5 // pred_check
        _
      $region10: #{tpu_custom_call.1} parent=5 // pred_check_branch
        %364 = sbr.rel (%p361) target = $region12
      $region11: #{tpu_custom_call.1} parent=5 // pred_region
        %s365 = ssub.s32 %s26, 1
        // Predicated region
        $region13: #{tpu_custom_call.1} parent=11 // pred_check
          %p366 = pneg %p73
        $region14: #{tpu_custom_call.1} parent=11 // pred_check_branch
          %368 = sbr.rel (%p366) target = $region16
        $region15: #{tpu_custom_call.1} parent=11 // pred_region
          _
        $region16: #{tpu_custom_call.1} parent=11 // pred_fallthru
          _
        // Predicated region
        $region17: #{tpu_custom_call.1} parent=11 // pred_check
          %p369 = pneg %p94
        $region18: #{tpu_custom_call.1} parent=11 // pred_check_branch
          %371 = sbr.rel (%p369) target = $region20
        $region19: #{tpu_custom_call.1} parent=11 // pred_region
          _
        $region20: #{tpu_custom_call.1} parent=11 // pred_fallthru
          _
        // Predicated region
        $region21: #{tpu_custom_call.1} parent=11 // pred_check
          %p372 = pneg %p115
        $region22: #{tpu_custom_call.1} parent=11 // pred_check_branch
          %374 = sbr.rel (%p372) target = $region24
        $region23: #{tpu_custom_call.1} parent=11 // pred_region
          _
        $region24: #{tpu_custom_call.1} parent=11 // pred_fallthru
          _
        // Predicated region
        $region25: #{tpu_custom_call.1} parent=11 // pred_check
          %p375 = pneg %p136
        $region26: #{tpu_custom_call.1} parent=11 // pred_check_branch
          %377 = sbr.rel (%p375) target = $region28
        $region27: #{tpu_custom_call.1} parent=11 // pred_region
          _
        $region28: #{tpu_custom_call.1} parent=11 // pred_fallthru
          _
        // Predicated region
        $region29: #{tpu_custom_call.1} parent=11 // pred_check
          %p378 = pneg %p157
        $region30: #{tpu_custom_call.1} parent=11 // pred_check_branch
          %380 = sbr.rel (%p378) target = $region32
        $region31: #{tpu_custom_call.1} parent=11 // pred_region
          _
        $region32: #{tpu_custom_call.1} parent=11 // pred_fallthru
          _
        // Predicated region
        $region33: #{tpu_custom_call.1} parent=11 // pred_check
          %p381 = pneg %p178
        $region34: #{tpu_custom_call.1} parent=11 // pred_check_branch
          %383 = sbr.rel (%p381) target = $region36
        $region35: #{tpu_custom_call.1} parent=11 // pred_region
          _
        $region36: #{tpu_custom_call.1} parent=11 // pred_fallthru
          _
        // Predicated region
        $region37: #{tpu_custom_call.1} parent=11 // pred_check
          %p384 = pneg %p199
        $region38: #{tpu_custom_call.1} parent=11 // pred_check_branch
          %386 = sbr.rel (%p384) target = $region40
        $region39: #{tpu_custom_call.1} parent=11 // pred_region
          _
        $region40: #{tpu_custom_call.1} parent=11 // pred_fallthru
          _
        // Predicated region
        $region41: #{tpu_custom_call.1} parent=11 // pred_check
          %p387 = pneg %p220
        $region42: #{tpu_custom_call.1} parent=11 // pred_check_branch
          %389 = sbr.rel (%p387) target = $region44
        $region43: #{tpu_custom_call.1} parent=11 // pred_region
          _
        $region44: #{tpu_custom_call.1} parent=11 // pred_fallthru
          _
        // Predicated region
        $region45: #{tpu_custom_call.1} parent=11 // pred_check
          %p390 = pneg %p241
        $region46: #{tpu_custom_call.1} parent=11 // pred_check_branch
          %392 = sbr.rel (%p390) target = $region48
        $region47: #{tpu_custom_call.1} parent=11 // pred_region
          _
        $region48: #{tpu_custom_call.1} parent=11 // pred_fallthru
          _
        // Predicated region
        $region49: #{tpu_custom_call.1} parent=11 // pred_check
          %p393 = pneg %p262
        $region50: #{tpu_custom_call.1} parent=11 // pred_check_branch
          %395 = sbr.rel (%p393) target = $region52
        $region51: #{tpu_custom_call.1} parent=11 // pred_region
          _
        $region52: #{tpu_custom_call.1} parent=11 // pred_fallthru
          _
        // Predicated region
        $region53: #{tpu_custom_call.1} parent=11 // pred_check
          %p396 = pneg %p283
        $region54: #{tpu_custom_call.1} parent=11 // pred_check_branch
          %398 = sbr.rel (%p396) target = $region56
        $region55: #{tpu_custom_call.1} parent=11 // pred_region
          _
        $region56: #{tpu_custom_call.1} parent=11 // pred_fallthru
          _
        // Predicated region
        $region57: #{tpu_custom_call.1} parent=11 // pred_check
          %p399 = pneg %p304
        $region58: #{tpu_custom_call.1} parent=11 // pred_check_branch
          %401 = sbr.rel (%p399) target = $region60
        $region59: #{tpu_custom_call.1} parent=11 // pred_region
          _
        $region60: #{tpu_custom_call.1} parent=11 // pred_fallthru
          _
        // Predicated region
        $region61: #{tpu_custom_call.1} parent=11 // pred_check
          %p402 = pneg %p325
        $region62: #{tpu_custom_call.1} parent=11 // pred_check_branch
          %404 = sbr.rel (%p402) target = $region64
        $region63: #{tpu_custom_call.1} parent=11 // pred_region
          _
        $region64: #{tpu_custom_call.1} parent=11 // pred_fallthru
          _
      $region12: #{tpu_custom_call.1} parent=5 // pred_fallthru
        _
      %p405 = scmp.lt.s32.totalorder %s26, 2
      // Predicated region
      $region65: #{tpu_custom_call.1} parent=5 // pred_check
        %p406 = pneg %p405
      $region66: #{tpu_custom_call.1} parent=5 // pred_check_branch
        %408 = sbr.rel (%p406) target = $region68
      $region67: #{tpu_custom_call.1} parent=5 // pred_region
        // Predicated region
        $region69: #{tpu_custom_call.1} parent=67 // pred_check
          %p409 = pneg %p46
        $region70: #{tpu_custom_call.1} parent=67 // pred_check_branch
          %411 = sbr.rel (%p409) target = $region72
        $region71: #{tpu_custom_call.1} parent=67 // pred_region
          %s412 = sand.u32 %s36, 1
          %s413 = scalar_lea.sflag [#allocation3], %s412
          %s414 = sand.u32 %s36, 1
          %s415 = smul.addr %s414, 32
          %s416 = scalar_lea.vmem [#allocation2], %s415
          %418 = vsyncadd %s413, 0
          %s419 = smul.addr %s26, 4
          %s420 = smul.addr %s419, 8
          %s421 = scalar_lea.hbm %s0, %s420
          %s422 = sshll.u32 %s421, 4
          %s423 = int_to_ptr.hbm [resolvable:$true] %s422
          %s424 = sshll.u32 %s416, 4
          %s425 = int_to_ptr.vmem [resolvable:$true] %s424
          %430 = dma.hbm_to_vmem [thread:$0]  %s423, 512, %s425, %s413, 256, 256, 16
        $region72: #{tpu_custom_call.1} parent=67 // pred_fallthru
          _
      $region68: #{tpu_custom_call.1} parent=5 // pred_fallthru
        _
      %p431 = scmp.le.s32.totalorder 1, %s26
      %p432 = scmp.lt.s32.totalorder %s26, 3
      %p433 = pnand %p431, %p432
      %p434 = pneg %p433
      // Predicated region
      $region73: #{tpu_custom_call.1} parent=5 // pred_check
        _
      $region74: #{tpu_custom_call.1} parent=5 // pred_check_branch
        %436 = sbr.rel (%p433) target = $region76
      $region75: #{tpu_custom_call.1} parent=5 // pred_region
        %s437 = ssub.s32 %s26, 1
        %s438 = sand.u32 %s39, 1
        %s439 = scalar_lea.sflag [#allocation3], %s438
        %s440 = sand.u32 %s39, 1
        %s441 = smul.addr %s440, 32
        %s442 = scalar_lea.vmem [#allocation2], %s441
        // Predicated region
        $region77: #{tpu_custom_call.1} parent=75 // pred_check
          %p443 = pneg %p52
        $region78: #{tpu_custom_call.1} parent=75 // pred_check_branch
          %445 = sbr.rel (%p443) target = $region80
        $region79: #{tpu_custom_call.1} parent=75 // pred_region
          %447 = dma.done %s439, 512
        $region80: #{tpu_custom_call.1} parent=75 // pred_fallthru
          _
        %s448 = sand.u32 %s39, 1
        %s449 = scalar_lea.sflag [#allocation3], %s448
        %s450 = sand.u32 %s39, 1
        %s451 = smul.addr %s450, 32
        %s452 = scalar_lea.vmem [#allocation2], %s451
        %p453 = pneg %p52
        %p454 = pneg %p49
        %p455 = pneg %p73
        %p456 = pneg %p70
        %p457 = pneg %p94
        %p458 = pneg %p91
        %p459 = pneg %p115
        %p460 = pneg %p112
        %p461 = pneg %p136
        %p462 = pneg %p133
        %p463 = pneg %p157
        %p464 = pneg %p154
        %p465 = pneg %p178
        %p466 = pneg %p175
        %p467 = pneg %p199
        %p468 = pneg %p196
        %p469 = pneg %p220
        %p470 = pneg %p217
        %p471 = pneg %p241
        %p472 = pneg %p238
        %p473 = pneg %p262
        %p474 = pneg %p259
        %p475 = pneg %p283
        %p476 = pneg %p280
        %p477 = pneg %p304
        %p478 = pneg %p301
        %p479 = pneg %p325
        %p480 = pneg %p322
        %p481 = pneg %p351
        %p482 = pneg %p348
        %s483 = sand.u32 %s338, 1
        %s484 = scalar_lea.sflag [#allocation4], %s483
        %s485 = sand.u32 %s338, 1
        %s486 = smul.addr %s485, 32
        %s487 = scalar_lea.vmem [#allocation5], %s486
        %v489 = vld [vmem:[%s442] sm:$0xff]
        %v490 = vld [vmem:[%s442 + $0x8] sm:$0xff]
        %v491 = vld [vmem:[%s442 + $0x10] sm:$0xff]
        %v492 = vld [vmem:[%s442 + $0x18] sm:$0xff]
        %v493 = vpack.c.bf16 %v491, %v489
        %v494 = vpack.c.bf16 %v492, %v490
        %vm499 = vcmp.lt.s32.totalorder %v489, 0
        %vm500 = vcmp.lt.s32.totalorder %v490, 0
        %vm501 = vcmp.lt.s32.totalorder %v491, 0
        %vm502 = vcmp.lt.s32.totalorder %v492, 0
        %v503 = vsel %vm499, 2147483647, 0
        %v504 = vsel %vm500, 2147483647, 0
        %v505 = vsel %vm501, 2147483647, 0
        %v506 = vsel %vm502, 2147483647, 0
        %v507 = vxor.u32 %v489, %v503
        %v508 = vxor.u32 %v490, %v504
        %v509 = vxor.u32 %v491, %v505
        %v510 = vxor.u32 %v492, %v506
        %v511 = vadd.f32 %v489, %v491
        %v512 = vrot.slane %v511, 4
        %v513 = vadd.f32 %v511, %v512
        %v514 = vrot.slane %v513, 2
        %v515 = vadd.f32 %v513, %v514
        %v516 = vrot.slane %v515, 1
        %v517 = vadd.f32 %v515, %v516
        %v518 = vadd.f32 %v490, %v492
        %v519 = vrot.slane %v518, 4
        %v520 = vadd.f32 %v518, %v519
        %v521 = vrot.slane %v520, 2
        %v522 = vadd.f32 %v520, %v521
        %v523 = vrot.slane %v522, 1
        %v524 = vadd.f32 %v522, %v523
        %v525 = vrcp.pop 16.0
        %v526 = vmul.f32 16.0, %v525
        %v527 = vsub.f32 1.0, %v526
        %v528 = vmul.f32 %v525, %v527
        %v529 = vadd.f32 %v525, %v528
        %vm530 = vweird.f32 %v525
        %v531 = vsel %vm530, %v525, %v529
        %v532 = vmul.f32 %v517, %v531
        %v533 = vmul.f32 %v524, %v531
        loop: start=0, step=1, limit=32
        $region81: #{tpu_custom_call.1} parent=75 // loop_pre_header
          _
        $region82: #{tpu_custom_call.1} parent=75 // loop_header
          %s535 = sphi 0, %s539
          %p536 = scmp.ge.s32.totalorder %s535, 32
          %v540 = vphi 2147483648, %v580
          %v541 = vphi 2147483648, %v581
          %v542 = vphi 2147483647, %v584
          %v543 = vphi 2147483647, %v585
        $region83: #{tpu_custom_call.1} parent=75 // loop_header_branch
          %538 = sbr.rel (%p536) target = $region87
        $region84: #{tpu_custom_call.1} parent=75 // loop_body
          %v544 = vshra.s32 %v540, 1
          %v545 = vshra.s32 %v541, 1
          %v546 = vshra.s32 %v542, 1
          %v547 = vshra.s32 %v543, 1
          %v548 = vadd.s32 %v544, %v546
          %v549 = vadd.s32 %v545, %v547
          %v550 = vor.u32 %v540, %v542
          %v551 = vor.u32 %v541, %v543
          %v552 = vand.u32 %v550, 1
          %v553 = vand.u32 %v551, 1
          %v554 = vadd.s32 %v548, %v552
          %v555 = vadd.s32 %v549, %v553
          %vm556 = vcmp.ge.s32.totalorder %v507, %v554
          %vm557 = vcmp.ge.s32.totalorder %v508, %v555
          %vm558 = vcmp.ge.s32.totalorder %v509, %v554
          %vm559 = vcmp.ge.s32.totalorder %v510, %v555
          %v560 = vsel %vm556, 1.0, 0.0
          %v561 = vsel %vm557, 1.0, 0.0
          %v562 = vsel %vm558, 1.0, 0.0
          %v563 = vsel %vm559, 1.0, 0.0
          %v564 = vadd.f32 %v560, %v562
          %v565 = vrot.slane %v564, 4
          %v566 = vadd.f32 %v564, %v565
          %v567 = vrot.slane %v566, 2
          %v568 = vadd.f32 %v566, %v567
          %v569 = vrot.slane %v568, 1
          %v570 = vadd.f32 %v568, %v569
          %v571 = vadd.f32 %v561, %v563
          %v572 = vrot.slane %v571, 4
          %v573 = vadd.f32 %v571, %v572
          %v574 = vrot.slane %v573, 2
          %v575 = vadd.f32 %v573, %v574
          %v576 = vrot.slane %v575, 1
          %v577 = vadd.f32 %v575, %v576
          %vm578 = vcmp.ge.f32.partialorder %v570, 9.0
          %vm579 = vcmp.ge.f32.partialorder %v577, 9.0
          %v580 = vsel %vm578, %v554, %v540
          %v581 = vsel %vm579, %v555, %v541
          %v582 = vsub.s32 %v554, 1
          %v583 = vsub.s32 %v555, 1
          %v584 = vsel %vm578, %v542, %v582
          %v585 = vsel %vm579, %v543, %v583
        $region85: #{tpu_custom_call.1} parent=75 // loop_footer
          %s539 = sadd.s32 1, %s535
        $region86: #{tpu_custom_call.1} parent=75 // loop_footer_branch
          %534 = sbr.rel target = $region82
        $region87: #{tpu_custom_call.1} parent=75 // loop_exit
          _
        %vm586 = vcmp.lt.s32.totalorder %v540, 0
        %vm587 = vcmp.lt.s32.totalorder %v541, 0
        %v588 = vsel %vm586, 2147483647, 0
        %v589 = vsel %vm587, 2147483647, 0
        %v590 = vxor.u32 %v540, %v588
        %v591 = vxor.u32 %v541, %v589
        %vm594 = vcmp.gt.s32.totalorder %v507, %v540
        %vm595 = vcmp.gt.s32.totalorder %v508, %v541
        %vm596 = vcmp.gt.s32.totalorder %v509, %v540
        %vm597 = vcmp.gt.s32.totalorder %v510, %v541
        %v598 = vsel %vm594, 1.0, 0.0
        %v599 = vsel %vm595, 1.0, 0.0
        %v600 = vsel %vm596, 1.0, 0.0
        %v601 = vsel %vm597, 1.0, 0.0
        %v602 = vadd.f32 %v598, %v600
        %v603 = vrot.slane %v602, 4
        %v604 = vadd.f32 %v602, %v603
        %v605 = vrot.slane %v604, 2
        %v606 = vadd.f32 %v604, %v605
        %v607 = vrot.slane %v606, 1
        %v608 = vadd.f32 %v606, %v607
        %v609 = vadd.f32 %v599, %v601
        %v610 = vrot.slane %v609, 4
        %v611 = vadd.f32 %v609, %v610
        %v612 = vrot.slane %v611, 2
        %v613 = vadd.f32 %v611, %v612
        %v614 = vrot.slane %v613, 1
        %v615 = vadd.f32 %v613, %v614
        %v616 = vsel %vm594, %v489, 0.0
        %v617 = vsel %vm595, %v490, 0.0
        %v618 = vsel %vm596, %v491, 0.0
        %v619 = vsel %vm597, %v492, 0.0
        %v620 = vadd.f32 %v616, %v618
        %v621 = vrot.slane %v620, 4
        %v622 = vadd.f32 %v620, %v621
        %v623 = vrot.slane %v622, 2
        %v624 = vadd.f32 %v622, %v623
        %v625 = vrot.slane %v624, 1
        %v626 = vadd.f32 %v624, %v625
        %v627 = vadd.f32 %v617, %v619
        %v628 = vrot.slane %v627, 4
        %v629 = vadd.f32 %v627, %v628
        %v630 = vrot.slane %v629, 2
        %v631 = vadd.f32 %v629, %v630
        %v632 = vrot.slane %v631, 1
        %v633 = vadd.f32 %v631, %v632
        %v634 = vsub.f32 9.0, %v608
        %v635 = vsub.f32 9.0, %v615
        %v636 = vmul.f32 %v634, %v590
        %v637 = vmul.f32 %v635, %v591
        %v638 = vadd.f32 %v626, %v636
        %v639 = vadd.f32 %v633, %v637
        %v640 = vmul.f32 %v638, 0.11111111
        %v641 = vmul.f32 %v639, 0.11111111
        %642 = vrot.lane.b32.xlu0 %v532, 17
        %v643 = vpop.permute.xlu0 %642
        %644 = vrot.lane.b32.xlu0 %v533, 17
        %v645 = vpop.permute.xlu0 %644
        %v646 = vlaneseq
        %v647 = vand.u32 %v646, 127
        %vm648 = vcmp.lt.s32.totalorder %v647, 17
        %v649 = vsel %vm648, %v643, %v645
        %v650 = vsel %vm648, %v645, %v643
        %651 = vrot.lane.b32.xlu0 %v640, 17
        %v652 = vpop.permute.xlu0 %651
        %653 = vrot.lane.b32.xlu0 %v641, 17
        %v654 = vpop.permute.xlu0 %653
        %v655 = vsel %vm648, %v652, %v654
        %v656 = vsel %vm648, %v654, %v652
        %v657 = vld [vmem:[%s1] ss:$8 sm:$0x3]
        %v660 = vrot.slane %v649, 7
        %vm661 = vcmask 1040384
        %v662 = vsel %vm661, %v650, %v660
        %v664 = vmul.f32 %v657, %v662
        %v665 = vadd.f32 %v664, 0.0
        %v666 = vld [vmem:[%s2] ss:$8 sm:$0x3]
        %v669 = vrot.slane %v655, 7
        %v670 = vsel %vm661, %v656, %v669
        %v672 = vmul.f32 %v666, %v670
        %v673 = vadd.f32 %v665, %v672
        %674 = vrot.lane.b32.xlu0 %v532, 16
        %v675 = vpop.permute.xlu0 %674
        %676 = vrot.lane.b32.xlu0 %v533, 16
        %v677 = vpop.permute.xlu0 %676
        %vm678 = vcmp.lt.s32.totalorder %v647, 16
        %v679 = vsel %vm678, %v675, %v677
        %v680 = vsel %vm678, %v677, %v675
        %681 = vrot.lane.b32.xlu0 %v640, 16
        %v682 = vpop.permute.xlu0 %681
        %683 = vrot.lane.b32.xlu0 %v641, 16
        %v684 = vpop.permute.xlu0 %683
        %v685 = vsel %vm678, %v682, %v684
        %v686 = vsel %vm678, %v684, %v682
        %s687 = scalar_lea.vmem %s1, 1
        %v688 = vld [vmem:[%s687] ss:$8 sm:$0x3]
        %v691 = vrot.slane %v679, 7
        %v692 = vsel %vm661, %v680, %v691
        %v694 = vmul.f32 %v688, %v692
        %v695 = vadd.f32 %v673, %v694
        %s696 = scalar_lea.vmem %s2, 1
        %v697 = vld [vmem:[%s696] ss:$8 sm:$0x3]
        %v700 = vrot.slane %v685, 7
        %v701 = vsel %vm661, %v686, %v700
        %v703 = vmul.f32 %v697, %v701
        %v704 = vadd.f32 %v695, %v703
        %705 = vrot.lane.b32.xlu0 %v532, 15
        %v706 = vpop.permute.xlu0 %705
        %707 = vrot.lane.b32.xlu0 %v533, 15
        %v708 = vpop.permute.xlu0 %707
        %vm709 = vcmp.lt.s32.totalorder %v647, 15
        %v710 = vsel %vm709, %v706, %v708
        %v711 = vsel %vm709, %v708, %v706
        %712 = vrot.lane.b32.xlu0 %v640, 15
        %v713 = vpop.permute.xlu0 %712
        %714 = vrot.lane.b32.xlu0 %v641, 15
        %v715 = vpop.permute.xlu0 %714
        %v716 = vsel %vm709, %v713, %v715
        %v717 = vsel %vm709, %v715, %v713
        %s718 = scalar_lea.vmem %s1, 2
        %v719 = vld [vmem:[%s718] ss:$8 sm:$0x3]
        %v722 = vrot.slane %v710, 7
        %v723 = vsel %vm661, %v711, %v722
        %v725 = vmul.f32 %v719, %v723
        %v726 = vadd.f32 %v704, %v725
        %s727 = scalar_lea.vmem %s2, 2
        %v728 = vld [vmem:[%s727] ss:$8 sm:$0x3]
        %v731 = vrot.slane %v716, 7
        %v732 = vsel %vm661, %v717, %v731
        %v734 = vmul.f32 %v728, %v732
        %v735 = vadd.f32 %v726, %v734
        %736 = vrot.lane.b32.xlu0 %v532, 1
        %v737 = vpop.permute.xlu0 %736
        %738 = vrot.lane.b32.xlu0 %v533, 1
        %v739 = vpop.permute.xlu0 %738
        %vm740 = vcmp.lt.s32.totalorder %v647, 1
        %v741 = vsel %vm740, %v737, %v739
        %v742 = vsel %vm740, %v739, %v737
        %743 = vrot.lane.b32.xlu0 %v640, 1
        %v744 = vpop.permute.xlu0 %743
        %745 = vrot.lane.b32.xlu0 %v641, 1
        %v746 = vpop.permute.xlu0 %745
        %v747 = vsel %vm740, %v744, %v746
        %v748 = vsel %vm740, %v746, %v744
        %s749 = scalar_lea.vmem %s1, 3
        %v750 = vld [vmem:[%s749] ss:$8 sm:$0x3]
        %v753 = vrot.slane %v741, 7
        %v754 = vsel %vm661, %v742, %v753
        %v756 = vmul.f32 %v750, %v754
        %v757 = vadd.f32 %v735, %v756
        %s758 = scalar_lea.vmem %s2, 3
        %v759 = vld [vmem:[%s758] ss:$8 sm:$0x3]
        %v762 = vrot.slane %v747, 7
        %v763 = vsel %vm661, %v748, %v762
        %v765 = vmul.f32 %v759, %v763
        %v766 = vadd.f32 %v757, %v765
        %s767 = scalar_lea.vmem %s1, 4
        %v768 = vld [vmem:[%s767] ss:$8 sm:$0x3]
        %v771 = vrot.slane %v533, 7
        %v772 = vsel %vm661, %v532, %v771
        %v774 = vmul.f32 %v768, %v772
        %v775 = vadd.f32 %v766, %v774
        %s776 = scalar_lea.vmem %s2, 4
        %v777 = vld [vmem:[%s776] ss:$8 sm:$0x3]
        %v780 = vrot.slane %v641, 7
        %v781 = vsel %vm661, %v640, %v780
        %v783 = vmul.f32 %v777, %v781
        %v784 = vadd.f32 %v775, %v783
        %785 = vrot.lane.b32.xlu0 %v532, 127
        %v786 = vpop.permute.xlu0 %785
        %787 = vrot.lane.b32.xlu0 %v533, 127
        %v788 = vpop.permute.xlu0 %787
        %vm789 = vcmp.lt.s32.totalorder %v647, 127
        %v790 = vsel %vm789, %v786, %v788
        %v791 = vsel %vm789, %v788, %v786
        %792 = vrot.lane.b32.xlu0 %v640, 127
        %v793 = vpop.permute.xlu0 %792
        %794 = vrot.lane.b32.xlu0 %v641, 127
        %v795 = vpop.permute.xlu0 %794
        %v796 = vsel %vm789, %v793, %v795
        %v797 = vsel %vm789, %v795, %v793
        %s798 = scalar_lea.vmem %s1, 5
        %v799 = vld [vmem:[%s798] ss:$8 sm:$0x3]
        %v802 = vrot.slane %v791, 7
        %v803 = vsel %vm661, %v790, %v802
        %v805 = vmul.f32 %v799, %v803
        %v806 = vadd.f32 %v784, %v805
        %s807 = scalar_lea.vmem %s2, 5
        %v808 = vld [vmem:[%s807] ss:$8 sm:$0x3]
        %v811 = vrot.slane %v797, 7
        %v812 = vsel %vm661, %v796, %v811
        %v814 = vmul.f32 %v808, %v812
        %v815 = vadd.f32 %v806, %v814
        %816 = vrot.lane.b32.xlu0 %v532, 113
        %v817 = vpop.permute.xlu0 %816
        %818 = vrot.lane.b32.xlu0 %v533, 113
        %v819 = vpop.permute.xlu0 %818
        %vm820 = vcmp.lt.s32.totalorder %v647, 113
        %v821 = vsel %vm820, %v817, %v819
        %v822 = vsel %vm820, %v819, %v817
        %823 = vrot.lane.b32.xlu0 %v640, 113
        %v824 = vpop.permute.xlu0 %823
        %825 = vrot.lane.b32.xlu0 %v641, 113
        %v826 = vpop.permute.xlu0 %825
        %v827 = vsel %vm820, %v824, %v826
        %v828 = vsel %vm820, %v826, %v824
        %s829 = scalar_lea.vmem %s1, 6
        %v830 = vld [vmem:[%s829] ss:$8 sm:$0x3]
        %v833 = vrot.slane %v822, 7
        %v834 = vsel %vm661, %v821, %v833
        %v836 = vmul.f32 %v830, %v834
        %v837 = vadd.f32 %v815, %v836
        %s838 = scalar_lea.vmem %s2, 6
        %v839 = vld [vmem:[%s838] ss:$8 sm:$0x3]
        %v842 = vrot.slane %v828, 7
        %v843 = vsel %vm661, %v827, %v842
        %v845 = vmul.f32 %v839, %v843
        %v846 = vadd.f32 %v837, %v845
        %847 = vrot.lane.b32.xlu0 %v532, 112
        %v848 = vpop.permute.xlu0 %847
        %849 = vrot.lane.b32.xlu0 %v533, 112
        %v850 = vpop.permute.xlu0 %849
        %vm851 = vcmp.lt.s32.totalorder %v647, 112
        %v852 = vsel %vm851, %v848, %v850
        %v853 = vsel %vm851, %v850, %v848
        %854 = vrot.lane.b32.xlu0 %v640, 112
        %v855 = vpop.permute.xlu0 %854
        %856 = vrot.lane.b32.xlu0 %v641, 112
        %v857 = vpop.permute.xlu0 %856
        %v858 = vsel %vm851, %v855, %v857
        %v859 = vsel %vm851, %v857, %v855
        %s860 = scalar_lea.vmem %s1, 7
        %v861 = vld [vmem:[%s860] ss:$8 sm:$0x3]
        %v864 = vrot.slane %v853, 7
        %v865 = vsel %vm661, %v852, %v864
        %v867 = vmul.f32 %v861, %v865
        %v868 = vadd.f32 %v846, %v867
        %s869 = scalar_lea.vmem %s2, 7
        %v870 = vld [vmem:[%s869] ss:$8 sm:$0x3]
        %v873 = vrot.slane %v859, 7
        %v874 = vsel %vm661, %v858, %v873
        %v876 = vmul.f32 %v870, %v874
        %v877 = vadd.f32 %v868, %v876
        %878 = vrot.lane.b32.xlu0 %v532, 111
        %v879 = vpop.permute.xlu0 %878
        %880 = vrot.lane.b32.xlu0 %v533, 111
        %v881 = vpop.permute.xlu0 %880
        %vm882 = vcmp.lt.s32.totalorder %v647, 111
        %v883 = vsel %vm882, %v879, %v881
        %v884 = vsel %vm882, %v881, %v879
        %885 = vrot.lane.b32.xlu0 %v640, 111
        %v886 = vpop.permute.xlu0 %885
        %887 = vrot.lane.b32.xlu0 %v641, 111
        %v888 = vpop.permute.xlu0 %887
        %v889 = vsel %vm882, %v886, %v888
        %v890 = vsel %vm882, %v888, %v886
        %s891 = scalar_lea.vmem %s1, 16
        %v892 = vld [vmem:[%s891] ss:$8 sm:$0x3]
        %v895 = vrot.slane %v884, 7
        %v896 = vsel %vm661, %v883, %v895
        %v898 = vmul.f32 %v892, %v896
        %v899 = vadd.f32 %v877, %v898
        %s900 = scalar_lea.vmem %s2, 16
        %v901 = vld [vmem:[%s900] ss:$8 sm:$0x3]
        %v904 = vrot.slane %v890, 7
        %v905 = vsel %vm661, %v889, %v904
        %v907 = vmul.f32 %v901, %v905
        %v908 = vadd.f32 %v899, %v907
        %v909 = vsub.f32 0.0, %v908
        %v910 = vmul.f32 %v909, 1.442695
        %v911 = vpow.pop %v910
        %v912 = vadd.f32 %v911, 1.0
        %v913 = vrcp.pop %v912
        %v914 = vmul.f32 %v912, %v913
        %v915 = vsub.f32 1.0, %v914
        %v916 = vmul.f32 %v913, %v915
        %v917 = vadd.f32 %v913, %v916
        %vm918 = vweird.f32 %v912
        %vm919 = vweird.f32 %v913
        %vm920 = vmor %vm918, %vm919
        %v921 = vsel %vm920, %v913, %v917
        %v922 = vand.u32 2147483647, %v912
        %vm923 = vcmp.eq.f32.partialorder %v922, 8.507059e+37
        %v924 = vand.u32 %v912, 2147483648
        %v925 = vor.u32 1.1754944e-38, %v924
        %v926 = vsel %vm923, %v925, %v921
        %v927 = vmul.f32 1.0, %v926
        loop: start=0, step=1, limit=32
        $region88: #{tpu_custom_call.1} parent=75 // loop_pre_header
          _
        $region89: #{tpu_custom_call.1} parent=75 // loop_header
          %s929 = sphi 0, %s933
          %p930 = scmp.ge.s32.totalorder %s929, 32
          %v934 = vphi 2147483648, %v966
          %v935 = vphi 2147483648, %v967
          %v936 = vphi 2147483647, %v970
          %v937 = vphi 2147483647, %v971
        $region90: #{tpu_custom_call.1} parent=75 // loop_header_branch
          %932 = sbr.rel (%p930) target = $region94
        $region91: #{tpu_custom_call.1} parent=75 // loop_body
          %v938 = vshra.s32 %v934, 1
          %v939 = vshra.s32 %v935, 1
          %v940 = vshra.s32 %v936, 1
          %v941 = vshra.s32 %v937, 1
          %v942 = vadd.s32 %v938, %v940
          %v943 = vadd.s32 %v939, %v941
          %v944 = vor.u32 %v934, %v936
          %v945 = vor.u32 %v935, %v937
          %v946 = vand.u32 %v944, 1
          %v947 = vand.u32 %v945, 1
          %v948 = vadd.s32 %v942, %v946
          %v949 = vadd.s32 %v943, %v947
          %vm950 = vcmp.ge.s32.totalorder %v507, %v948
          %vm951 = vcmp.ge.s32.totalorder %v508, %v948
          %vm952 = vcmp.ge.s32.totalorder %v509, %v949
          %vm953 = vcmp.ge.s32.totalorder %v510, %v949
          %v954 = vsel %vm950, 1.0, 0.0
          %v955 = vsel %vm951, 1.0, 0.0
          %v956 = vsel %vm952, 1.0, 0.0
          %v957 = vsel %vm953, 1.0, 0.0
          %v958 = vadd.f32 %v954, %v955
          %959 = vadd.xlane.f32.xlu0 %v958
          %v960 = vpop.xlane.xlu0 %959
          %v961 = vadd.f32 %v956, %v957
          %962 = vadd.xlane.f32.xlu0 %v961
          %v963 = vpop.xlane.xlu0 %962
          %vm964 = vcmp.ge.f32.partialorder %v960, 225.0
          %vm965 = vcmp.ge.f32.partialorder %v963, 225.0
          %v966 = vsel %vm964, %v948, %v934
          %v967 = vsel %vm965, %v949, %v935
          %v968 = vsub.s32 %v948, 1
          %v969 = vsub.s32 %v949, 1
          %v970 = vsel %vm964, %v936, %v968
          %v971 = vsel %vm965, %v937, %v969
        $region92: #{tpu_custom_call.1} parent=75 // loop_footer
          %s933 = sadd.s32 1, %s929
        $region93: #{tpu_custom_call.1} parent=75 // loop_footer_branch
          %928 = sbr.rel target = $region89
        $region94: #{tpu_custom_call.1} parent=75 // loop_exit
          _
        %vm972 = vcmp.lt.s32.totalorder %v934, 0
        %vm973 = vcmp.lt.s32.totalorder %v935, 0
        %v974 = vsel %vm972, 2147483647, 0
        %v975 = vsel %vm973, 2147483647, 0
        %v976 = vxor.u32 %v934, %v974
        %v977 = vxor.u32 %v935, %v975
        %vm980 = vcmp.gt.s32.totalorder %v507, %v934
        %vm981 = vcmp.gt.s32.totalorder %v508, %v934
        %vm982 = vcmp.gt.s32.totalorder %v509, %v935
        %vm983 = vcmp.gt.s32.totalorder %v510, %v935
        %v984 = vsel %vm980, 1.0, 0.0
        %v985 = vsel %vm981, 1.0, 0.0
        %v986 = vsel %vm982, 1.0, 0.0
        %v987 = vsel %vm983, 1.0, 0.0
        %v988 = vadd.f32 %v984, %v985
        %989 = vadd.xlane.f32.xlu0 %v988
        %v990 = vpop.xlane.xlu0 %989
        %v991 = vadd.f32 %v986, %v987
        %992 = vadd.xlane.f32.xlu0 %v991
        %v993 = vpop.xlane.xlu0 %992
        %v994 = vsel %vm980, %v489, 0.0
        %v995 = vsel %vm981, %v490, 0.0
        %v996 = vsel %vm982, %v491, 0.0
        %v997 = vsel %vm983, %v492, 0.0
        %v998 = vadd.f32 %v994, %v995
        %999 = vadd.xlane.f32.xlu0 %v998
        %v1000 = vpop.xlane.xlu0 %999
        %v1001 = vadd.f32 %v996, %v997
        %1002 = vadd.xlane.f32.xlu0 %v1001
        %v1003 = vpop.xlane.xlu0 %1002
        %v1004 = vsub.f32 225.0, %v990
        %v1005 = vsub.f32 225.0, %v993
        %v1006 = vmul.f32 %v1004, %v976
        %v1007 = vmul.f32 %v1005, %v977
        %v1008 = vadd.f32 %v1000, %v1006
        %v1009 = vadd.f32 %v1003, %v1007
        %v1010 = vmul.f32 %v1008, 0.0044444446
        %v1011 = vmul.f32 %v1009, 0.0044444446
        %v1012 = vld [vmem:[%s3] sm:$0xff]
        %vm1013 = vcmask 130048
        %v1015 = vsel %vm1013, %v1012, 0
        %1017 = vmatpush.msra.mxu0 0.0
        %1018 = vmatpush.msra.mxu0 0.0
        %1019 = vmatpush.msra.mxu0 0.0
        %1020 = vmatpush.msra.mxu0 0.0
        %1021 = vmatpush.msra.mxu0 0.0
        %1022 = vmatpush.msra.mxu0 0.0
        %1023 = vmatpush.msra.mxu0 0.0
        %1024 = vmatpush.msra.mxu0 0.0
        %1025 = vmatpush.msra.mxu0 0.0
        %1026 = vmatpush.msra.mxu0 0.0
        %1027 = vmatpush.msra.mxu0 0.0
        %1028 = vmatpush.msra.mxu0 0.0
        %1029 = vmatpush.msra.mxu0 0.0
        %1030 = vmatpush.msra.mxu0 0.0
        %1031 = vmatpush.msra.mxu0 %v1011
        %1032 = vmatpush.msra.mxu0 %v1010
        %1033 = vmatmul.f32.gmra.mxu0 %v1015
        %v1034 = vpop.f32.mrf.mxu0
        %v1035 = vadd.f32 0.0, %v1034
        %1036 = vdwg.mxu0
        %v1037 = vld [vmem:[%s4] sm:$0xff]
        %v1038 = vld [vmem:[%s4 + $0x8] sm:$0xff]
        %vm1039 = vcmask 64512
        %v1041 = vsel %vm1039, %v1037, 0
        %v1044 = vsel %vm1039, %v1038, 0
        %1046 = vmatpush.msra.mxu0 0.0
        %1047 = vmatpush.msra.mxu0 0.0
        %1048 = vmatpush.msra.mxu0 0.0
        %1049 = vmatpush.msra.mxu0 0.0
        %1050 = vmatpush.msra.mxu0 0.0
        %1051 = vmatpush.msra.mxu0 0.0
        %1052 = vmatpush.msra.mxu0 0.0
        %1053 = vmatpush.msra.mxu0 0.0
        %1054 = vmatpush.msra.mxu0 0.0
        %1055 = vmatpush.msra.mxu0 0.0
        %1056 = vmatpush.msra.mxu0 0.0
        %1057 = vmatpush.msra.mxu0 0.0
        %1058 = vmatpush.msra.mxu0 0.0
        %1059 = vmatpush.msra.mxu0 0.0
        %1060 = vmatpush.msra.mxu0 0.0
        %1061 = vmatpush.msra.mxu0 %v1035
        %1062 = vmatmul.f32.gmra.mxu0 %v1041
        %v1063 = vpop.f32.mrf.mxu0
        %v1064 = vadd.f32 0.0, %v1063
        %1065 = vmatmul.f32.gmra.mxu0 %v1044
        %v1066 = vpop.f32.mrf.mxu0
        %v1067 = vadd.f32 0.0, %v1066
        %1068 = vdwg.mxu0
        %v1069 = vsub.f32 0.0, %v1064
        %v1070 = vsub.f32 0.0, %v1067
        %v1071 = vmul.f32 %v1069, 1.442695
        %v1072 = vpow.pop %v1071
        %v1073 = vmul.f32 %v1070, 1.442695
        %v1074 = vpow.pop %v1073
        %v1075 = vadd.f32 %v1072, 1.0
        %v1076 = vadd.f32 %v1074, 1.0
        %v1077 = vrcp.pop %v1075
        %v1078 = vmul.f32 %v1075, %v1077
        %v1079 = vsub.f32 1.0, %v1078
        %v1080 = vmul.f32 %v1077, %v1079
        %v1081 = vadd.f32 %v1077, %v1080
        %vm1082 = vweird.f32 %v1075
        %vm1083 = vweird.f32 %v1077
        %vm1084 = vmor %vm1082, %vm1083
        %v1085 = vsel %vm1084, %v1077, %v1081
        %v1086 = vand.u32 2147483647, %v1075
        %vm1087 = vcmp.eq.f32.partialorder %v1086, 8.507059e+37
        %v1088 = vand.u32 %v1075, 2147483648
        %v1089 = vor.u32 1.1754944e-38, %v1088
        %v1090 = vsel %vm1087, %v1089, %v1085
        %v1091 = vmul.f32 1.0, %v1090
        %v1092 = vrcp.pop %v1076
        %v1093 = vmul.f32 %v1076, %v1092
        %v1094 = vsub.f32 1.0, %v1093
        %v1095 = vmul.f32 %v1092, %v1094
        %v1096 = vadd.f32 %v1092, %v1095
        %vm1097 = vweird.f32 %v1076
        %vm1098 = vweird.f32 %v1092
        %vm1099 = vmor %vm1097, %vm1098
        %v1100 = vsel %vm1099, %v1092, %v1096
        %v1101 = vand.u32 2147483647, %v1076
        %vm1102 = vcmp.eq.f32.partialorder %v1101, 8.507059e+37
        %v1103 = vand.u32 %v1076, 2147483648
        %v1104 = vor.u32 1.1754944e-38, %v1103
        %v1105 = vsel %vm1102, %v1104, %v1100
        %v1106 = vmul.f32 1.0, %v1105
        %1108 = vset.pattern.permute.xlu0 0
        %1109 = vperm.xlu0 %1108, %v1091
        %v1110 = vpop.permute.xlu0 %1109
        %1113 = vset.pattern.permute.xlu0 0
        %1114 = vperm.xlu0 %1113, %v1106
        %v1115 = vpop.permute.xlu0 %1114
        %v1117 = vmul.f32 %v489, %v1110
        %v1118 = vmul.f32 %v490, %v1110
        %v1119 = vmul.f32 %v491, %v1115
        %v1120 = vmul.f32 %v492, %v1115
        %v1122 = vperm.slane %v927, 0
        %v1123 = vperm.slane %v927, 1
        %v1126 = vmul.f32 %v489, %v1122
        %v1127 = vmul.f32 %v490, %v1123
        %v1128 = vmul.f32 %v491, %v1122
        %v1129 = vmul.f32 %v492, %v1123
        %v1130 = vadd.f32 %v1126, %v1117
        %v1131 = vadd.f32 %v1127, %v1118
        %v1132 = vadd.f32 %v1128, %v1119
        %v1133 = vadd.f32 %v1129, %v1120
        %v1134 = vld [vmem:[%s5] sm:$0xf]
        %v1135 = vld [vmem:[%s5 + $0x4] sm:$0xf]
        %v1138 = vunpack.c.l.b16 %v1134
        %v1139 = vunpack.c.l.b16 %v1135
        %v1140 = vpack.c.b16 %v1139, %v1138
        %v1142 = vsel %vm1013, %v1140, 0
        %1144 = vmatpush.bf16.msra.mxu0 0
        %1145 = vmatpush.bf16.msra.mxu0 0
        %1146 = vmatpush.bf16.msra.mxu0 0
        %1147 = vmatpush.bf16.msra.mxu0 0
        %1148 = vmatpush.bf16.msra.mxu0 0
        %1149 = vmatpush.bf16.msra.mxu0 0
        %1150 = vmatpush.bf16.msra.mxu0 0
        %1151 = vmatpush.bf16.msra.mxu0 %v493
        %1152 = vmatmul.bf16.gmra.mxu0 %v1142
        %v1153 = vpop.f32.mrf.mxu0
        %v1154 = vadd.f32 0.0, %v1153
        %v1155 = vpop.f32.mrf.mxu0
        %v1156 = vadd.f32 0.0, %v1155
        %1157 = vdwg.mxu0
        %1158 = vmatpush.bf16.msra.mxu0 0
        %1159 = vmatpush.bf16.msra.mxu0 0
        %1160 = vmatpush.bf16.msra.mxu0 0
        %1161 = vmatpush.bf16.msra.mxu0 0
        %1162 = vmatpush.bf16.msra.mxu0 0
        %1163 = vmatpush.bf16.msra.mxu0 0
        %1164 = vmatpush.bf16.msra.mxu0 0
        %1165 = vmatpush.bf16.msra.mxu0 %v494
        %1166 = vmatmul.bf16.gmra.mxu0 %v1142
        %v1167 = vpop.f32.mrf.mxu0
        %v1168 = vadd.f32 0.0, %v1167
        %v1169 = vpop.f32.mrf.mxu0
        %v1170 = vadd.f32 0.0, %v1169
        %1171 = vdwg.mxu0
        %v1172 = vld [vmem:[%s6] sm:$0xff]
        %v1173 = vld [vmem:[%s6 + $0x8] sm:$0xff]
        %1175 = vset.pattern.permute.xlu0 0
        %1176 = vperm.xlu0 %1175, %v1172
        %v1177 = vpop.permute.xlu0 %1176
        %1180 = vset.pattern.permute.xlu0 0
        %1181 = vperm.xlu0 %1180, %v1173
        %v1182 = vpop.permute.xlu0 %1181
        %v1184 = vmul.f32 %v1154, %v1177
        %v1185 = vmul.f32 %v1168, %v1177
        %v1186 = vmul.f32 %v1156, %v1182
        %v1187 = vmul.f32 %v1170, %v1182
        %v1188 = vld [vmem:[%s7] sm:$0xff]
        %v1189 = vld [vmem:[%s7 + $0x8] sm:$0xff]
        %1191 = vset.pattern.permute.xlu0 0
        %1192 = vperm.xlu0 %1191, %v1188
        %v1193 = vpop.permute.xlu0 %1192
        %1196 = vset.pattern.permute.xlu0 0
        %1197 = vperm.xlu0 %1196, %v1189
        %v1198 = vpop.permute.xlu0 %1197
        %v1200 = vadd.f32 %v1184, %v1193
        %v1201 = vadd.f32 %v1185, %v1193
        %v1202 = vadd.f32 %v1186, %v1198
        %v1203 = vadd.f32 %v1187, %v1198
        %v1204 = vpack.c.bf16 %v1132, %v1130
        %v1205 = vpack.c.bf16 %v1133, %v1131
        %v1206 = vld [vmem:[%s8] sm:$0x3]
        %v1207 = vld [vmem:[%s9] sm:$0x3]
        %v1209 = vsel %vm1013, %v1207, 0
        %1211 = vmatpush.bf16.msra.mxu0 0
        %1212 = vmatpush.bf16.msra.mxu0 0
        %1213 = vmatpush.bf16.msra.mxu0 0
        %1214 = vmatpush.bf16.msra.mxu0 0
        %1215 = vmatpush.bf16.msra.mxu0 0
        %1216 = vmatpush.bf16.msra.mxu0 0
        %1217 = vmatpush.bf16.msra.mxu0 0
        %1218 = vmatpush.bf16.msra.mxu0 %v493
        %1219 = vmatmul.bf16.gmra.mxu0 %v1209
        %v1220 = vpop.f32.mrf.mxu0
        %v1221 = vadd.f32 0.0, %v1220
        %v1222 = vpop.f32.mrf.mxu0
        %1223 = vdwg.mxu0
        %1224 = vmatpush.bf16.msra.mxu0 0
        %1225 = vmatpush.bf16.msra.mxu0 0
        %1226 = vmatpush.bf16.msra.mxu0 0
        %1227 = vmatpush.bf16.msra.mxu0 0
        %1228 = vmatpush.bf16.msra.mxu0 0
        %1229 = vmatpush.bf16.msra.mxu0 0
        %1230 = vmatpush.bf16.msra.mxu0 0
        %1231 = vmatpush.bf16.msra.mxu0 %v494
        %1232 = vmatmul.bf16.gmra.mxu0 %v1209
        %v1233 = vpop.f32.mrf.mxu0
        %v1234 = vadd.f32 0.0, %v1233
        %v1235 = vpop.f32.mrf.mxu0
        %1236 = vdwg.mxu0
        %v1238 = vsel %vm1013, %v1206, 0
        %1240 = vmatpush.bf16.msra.mxu0 0
        %1241 = vmatpush.bf16.msra.mxu0 0
        %1242 = vmatpush.bf16.msra.mxu0 0
        %1243 = vmatpush.bf16.msra.mxu0 0
        %1244 = vmatpush.bf16.msra.mxu0 0
        %1245 = vmatpush.bf16.msra.mxu0 0
        %1246 = vmatpush.bf16.msra.mxu0 0
        %1247 = vmatpush.bf16.msra.mxu0 %v1204
        %1248 = vmatmul.bf16.gmra.mxu0 %v1238
        %v1249 = vpop.f32.mrf.mxu0
        %v1250 = vadd.f32 %v1221, %v1249
        %v1251 = vpop.f32.mrf.mxu0
        %1252 = vdwg.mxu0
        %1253 = vmatpush.bf16.msra.mxu0 0
        %1254 = vmatpush.bf16.msra.mxu0 0
        %1255 = vmatpush.bf16.msra.mxu0 0
        %1256 = vmatpush.bf16.msra.mxu0 0
        %1257 = vmatpush.bf16.msra.mxu0 0
        %1258 = vmatpush.bf16.msra.mxu0 0
        %1259 = vmatpush.bf16.msra.mxu0 0
        %1260 = vmatpush.bf16.msra.mxu0 %v1205
        %1261 = vmatmul.bf16.gmra.mxu0 %v1238
        %v1262 = vpop.f32.mrf.mxu0
        %v1263 = vadd.f32 %v1234, %v1262
        %v1264 = vpop.f32.mrf.mxu0
        %1265 = vdwg.mxu0
        %v1266 = vld [vmem:[%s10] sm:$0xf]
        %1268 = vset.pattern.permute.xlu0 0
        %1269 = vperm.xlu0 %1268, %v1266
        %v1270 = vpop.permute.xlu0 %1269
        %v1272 = vmul.f32 %v1250, %v1270
        %v1273 = vmul.f32 %v1263, %v1270
        %v1274 = vld [vmem:[%s11] sm:$0xf]
        %1276 = vset.pattern.permute.xlu0 0
        %1277 = vperm.xlu0 %1276, %v1274
        %v1278 = vpop.permute.xlu0 %1277
        %v1280 = vadd.f32 %v1272, %v1278
        %v1281 = vadd.f32 %v1273, %v1278
        %v1282 = vmax.f32 %v1280, 0.0
        %v1283 = vmax.f32 %v1281, 0.0
        %v1284 = vld [vmem:[%s12] sm:$0xf]
        %v1285 = vld [vmem:[%s12 + $0x4] sm:$0xf]
        %v1286 = vpack.c.bf16 %v1282, %v1282
        %v1287 = vpack.c.bf16 %v1283, %v1283
        %v1288 = vld [vmem:[%s13] sm:$0xff]
        %v1289 = vld [vmem:[%s13 + $0x8] sm:$0xff]
        %1291 = vset.pattern.permute.xlu0 0
        %1292 = vperm.xlu0 %1291, %v1288
        %v1293 = vpop.permute.xlu0 %1292
        %1296 = vset.pattern.permute.xlu0 0
        %1297 = vperm.xlu0 %1296, %v1289
        %v1298 = vpop.permute.xlu0 %1297
        %v1302 = vunpack.c.l.b16 %v1284
        %v1303 = vunpack.c.l.b16 %v1285
        %v1304 = vpack.c.b16 %v1303, %v1302
        %vm1305 = vcmask 31744
        %v1307 = vsel %vm1305, %v1304, 0
        %vm1309 = vcmask 1041408
        %v1311 = vsel %vm1309, %v1286, 0
        %v1314 = vsel %vm1309, %v1287, 0
        %1316 = vmatpush.bf16.msra.mxu0 0
        %1317 = vmatpush.bf16.msra.mxu0 0
        %1318 = vmatpush.bf16.msra.mxu0 0
        %1319 = vmatpush.bf16.msra.mxu0 0
        %1320 = vmatpush.bf16.msra.mxu0 0
        %1321 = vmatpush.bf16.msra.mxu0 0
        %1322 = vmatpush.bf16.msra.mxu0 0
        %1323 = vmatpush.bf16.msra.mxu0 %v1311
        %1324 = vmatmul.bf16.gmra.mxu0 %v1307
        %v1325 = vpop.f32.mrf.mxu0
        %v1326 = vadd.f32 %v1293, %v1325
        %v1327 = vpop.f32.mrf.mxu0
        %v1328 = vadd.f32 %v1298, %v1327
        %1329 = vdwg.mxu0
        %1330 = vmatpush.bf16.msra.mxu0 0
        %1331 = vmatpush.bf16.msra.mxu0 0
        %1332 = vmatpush.bf16.msra.mxu0 0
        %1333 = vmatpush.bf16.msra.mxu0 0
        %1334 = vmatpush.bf16.msra.mxu0 0
        %1335 = vmatpush.bf16.msra.mxu0 0
        %1336 = vmatpush.bf16.msra.mxu0 0
        %1337 = vmatpush.bf16.msra.mxu0 %v1314
        %1338 = vmatmul.bf16.gmra.mxu0 %v1307
        %v1339 = vpop.f32.mrf.mxu0
        %v1340 = vadd.f32 %v1293, %v1339
        %v1341 = vpop.f32.mrf.mxu0
        %v1342 = vadd.f32 %v1298, %v1341
        %1343 = vdwg.mxu0
        %v1344 = vmax.f32 %v1326, %v1340
        %1345 = vmax.xlane.f32.xlu0 %v1344
        %v1346 = vpop.xlane.xlu0 %1345
        %v1347 = vmax.f32 %v1328, %v1342
        %1348 = vmax.xlane.f32.xlu0 %v1347
        %v1349 = vpop.xlane.xlu0 %1348
        %v1350 = vsub.f32 %v1326, %v1346
        %v1351 = vsub.f32 %v1340, %v1346
        %v1352 = vsub.f32 %v1328, %v1349
        %v1353 = vsub.f32 %v1342, %v1349
        %v1354 = vmul.f32 %v1350, 1.442695
        %v1355 = vpow.pop %v1354
        %v1356 = vmul.f32 %v1351, 1.442695
        %v1357 = vpow.pop %v1356
        %v1358 = vmul.f32 %v1352, 1.442695
        %v1359 = vpow.pop %v1358
        %v1360 = vmul.f32 %v1353, 1.442695
        %v1361 = vpow.pop %v1360
        %v1362 = vadd.f32 %v1355, %v1357
        %1363 = vadd.xlane.f32.xlu0 %v1362
        %v1364 = vpop.xlane.xlu0 %1363
        %v1365 = vadd.f32 %v1359, %v1361
        %1366 = vadd.xlane.f32.xlu0 %v1365
        %v1367 = vpop.xlane.xlu0 %1366
        %v1368 = vrcp.pop %v1364
        %v1369 = vrcp.pop %v1367
        %v1370 = vmul.f32 %v1355, %v1368
        %v1371 = vmul.f32 %v1357, %v1368
        %v1372 = vmul.f32 %v1359, %v1369
        %v1373 = vmul.f32 %v1361, %v1369
        %v1374 = vmul.f32 %v1370, %v1200
        %v1375 = vmul.f32 %v1371, %v1201
        %v1376 = vmul.f32 %v1372, %v1202
        %v1377 = vmul.f32 %v1373, %v1203
        %v1378 = vadd.f32 %v1130, %v1374
        %v1379 = vadd.f32 %v1131, %v1375
        %v1380 = vadd.f32 %v1132, %v1376
        %v1381 = vadd.f32 %v1133, %v1377
        %1382 = vst [vmem:[%s487] sm:$0xff] %v1378
        %1383 = vst [vmem:[%s487 + $0x8] sm:$0xff] %v1379
        %1384 = vst [vmem:[%s487 + $0x10] sm:$0xff] %v1380
        %1385 = vst [vmem:[%s487 + $0x18] sm:$0xff] %v1381
        %s1386 = sand.u32 %s338, 1
        %s1387 = scalar_lea.sflag [#allocation4], %s1386
        %s1388 = sand.u32 %s338, 1
        %s1389 = smul.addr %s1388, 32
        %s1390 = scalar_lea.vmem [#allocation5], %s1389
        // Predicated region
        $region95: #{tpu_custom_call.1} parent=75 // pred_check
          %p1391 = pneg %p348
        $region96: #{tpu_custom_call.1} parent=75 // pred_check_branch
          %1393 = sbr.rel (%p1391) target = $region98
        $region97: #{tpu_custom_call.1} parent=75 // pred_region
          %1395 = vsyncadd %s1387, 0
          %s1396 = smul.addr %s31, 4
          %s1397 = smul.addr %s1396, 8
          %s1398 = scalar_lea.hbm %s14, %s1397
          %s1399 = sshll.u32 %s1390, 4
          %s1400 = int_to_ptr.vmem [resolvable:$true] %s1399
          %s1401 = sshll.u32 %s1398, 4
          %s1402 = int_to_ptr.hbm [resolvable:$true] %s1401
          %1407 = dma.vmem_to_hbm [thread:$0]  %s1400, 512, %s1402, %s1387, 256, 256, 16
        $region98: #{tpu_custom_call.1} parent=75 // pred_fallthru
          _
      $region76: #{tpu_custom_call.1} parent=5 // pred_fallthru
        _
      %p1408 = scmp.le.s32.totalorder 2, %s26
      // Predicated region
      $region99: #{tpu_custom_call.1} parent=5 // pred_check
        %p1409 = pneg %p1408
      $region100: #{tpu_custom_call.1} parent=5 // pred_check_branch
        %1411 = sbr.rel (%p1409) target = $region102
      $region101: #{tpu_custom_call.1} parent=5 // pred_region
        %s1412 = ssub.s32 %s26, 2
        // Predicated region
        $region103: #{tpu_custom_call.1} parent=101 // pred_check
          %p1413 = pneg %p354
        $region104: #{tpu_custom_call.1} parent=101 // pred_check_branch
          %1415 = sbr.rel (%p1413) target = $region106
        $region105: #{tpu_custom_call.1} parent=101 // pred_region
          %s1416 = sand.u32 %s339, 1
          %s1417 = scalar_lea.sflag [#allocation4], %s1416
          %s1418 = sand.u32 %s339, 1
          %s1419 = smul.addr %s1418, 32
          %s1420 = scalar_lea.vmem [#allocation5], %s1419
          %1422 = dma.done %s1417, 512
        $region106: #{tpu_custom_call.1} parent=101 // pred_fallthru
          _
      $region102: #{tpu_custom_call.1} parent=5 // pred_fallthru
        _
    $region6: #{tpu_custom_call.1} parent=1 // loop_footer
      %s30 = sadd.s32 1, %s26
    $region7: #{tpu_custom_call.1} parent=1 // loop_footer_branch
      %25 = sbr.rel target = $region3
    $region8: #{tpu_custom_call.1} parent=1 // loop_exit
      _
    %1423 = vsyncpa [#allocation3], 1
    %s1424 = scalar_lea.sflag [#allocation3], 1
    %1425 = vsyncpa %s1424, 1
    %1426 = vsyncpa [#allocation4], 1
    %s1427 = scalar_lea.sflag [#allocation4], 1
    %1428 = vsyncpa %s1427, 1

</llo_original>
